<compile_context>
chip_gen: v6e
topology: v6e:2x2x1
jax: 0.10.0
libtpu: 0.0.40
codegen_flags: <defaults>
</compile_context>

<pallas_src>
import functools

import jax
import jax.numpy as jnp
from jax import lax
from jax.experimental import pallas as pl
from jax.experimental.pallas import tpu as pltpu

EPS = 1e-6
_UNROLL_LAYERS = 4                            # unroll the layer loop up to this L
_RESIDENT_WEIGHT_BUDGET = 40 * 1024 * 1024    # auto-switch to streaming above this


def _round_up(x, m):
    return (x + m - 1) // m * m


def _layer_norm(h, d_real, needs_mask, mask_ref, alpha_ref, beta_ref):
    """Custom LayerNorm: (x - mean) / sqrt(std_unbiased + eps) * beta + alpha."""
    denom = max(d_real - 1, 1)        # guard d_real == 1 (torch.std degenerate)
    mean = jnp.sum(h, axis=-1, keepdims=True) * (1.0 / d_real)
    diff = h - mean
    # Padded lanes of h are exactly zero (padded W cols / b entries / x lanes
    # are zero), so the sum above is exact; only the variance needs the mask.
    diff_m = diff * mask_ref[...] if needs_mask else diff
    var = jnp.sum(diff_m * diff_m, axis=-1, keepdims=True) * (1.0 / denom)
    std = jnp.sqrt(var)                        # torch.std (unbiased, ddof=1)
    inv = lax.rsqrt(std + EPS)                 # (TR, 1) on the EUP slot
    scale = inv * beta_ref[0]                  # fold beta into per-row scale
    return diff * scale + alpha_ref[0]


def _resident_kernel(d_real, needs_mask, alpha_ref, beta_ref, mask_ref,
                     x_ref, w_ref, b_ref, o_ref):
    # x_ref : (TR, Dp) f32 row tile
    # w_ref : (L, Dp, Dp) bf16  VMEM-resident, single-buffered
    # b_ref : (L, 1, Dp) f32,  mask_ref: (1, Dp) f32,  alpha/beta: (1,) SMEM
    h = x_ref[...].astype(jnp.float32)
    n_layers = w_ref.shape[0]

    # TODO(synk): the real DecoderBlock layers (self-/cross-attention consuming
    # encoder_output, src_mask, target_mask) are externally supplied modules
    # with unknown internals; modelled as residual Linear stand-ins.
    def layer(l, h):
        s = jnp.dot(h.astype(jnp.bfloat16), w_ref[l],
                    preferred_element_type=jnp.float32)   # bf16 MXU, f32 acc
        return h + s + b_ref[l]

    if n_layers <= _UNROLL_LAYERS:
        for l in range(n_layers):
            h = layer(l, h)
    else:
        # fori_loop bounds vreg live ranges for deep stacks (avoids spills).
        h = lax.fori_loop(0, n_layers, layer, h)

    o_ref[...] = _layer_norm(h, d_real, needs_mask, mask_ref,
                             alpha_ref, beta_ref).astype(o_ref.dtype)


def _stream_kernel(d_real, needs_mask, alpha_ref, beta_ref, mask_ref,
                   x_ref, w_ref, b_ref, o_ref, h_ref):
    # Weight-streaming variant: grid = (row_tiles, L). One layer's (Dp, Dp)
    # slab is double-buffered per step (weight DMA overlaps the MXU) and the
    # VMEM footprint is independent of L (important on v7x's 64 MiB / core).
    l = pl.program_id(1)
    n_l = pl.num_programs(1)

    @pl.when(l == 0)
    def _():
        h_ref[...] = x_ref[...].astype(jnp.float32)

    h = h_ref[...]
    s = jnp.dot(h.astype(jnp.bfloat16), w_ref[0],
                preferred_element_type=jnp.float32)
    h = h + s + b_ref[0]
    h_ref[...] = h

    @pl.when(l == n_l - 1)
    def _():
        o_ref[...] = _layer_norm(h, d_real, needs_mask, mask_ref,
                                 alpha_ref, beta_ref).astype(o_ref.dtype)


def prepare_decoder_params(w_stack, b_stack):
    """One-time (per model) lane padding + bf16 cast of the stand-in layer
    parameters — hoisted out of the per-call forward path."""
    L, D, _ = w_stack.shape
    Dp = _round_up(D, 128)
    w_p = jnp.zeros((L, Dp, Dp), jnp.bfloat16).at[:, :D, :D].set(
        w_stack.astype(jnp.bfloat16))
    b_p = jnp.zeros((L, 1, Dp), jnp.float32).at[:, 0, :D].set(
        b_stack.astype(jnp.float32))
    mask = (jnp.arange(Dp) < D).astype(jnp.float32).reshape(1, Dp)
    return w_p, b_p, mask, D


def decoder_forward(x, params, alpha, beta, *, row_tile=512, mode="auto",
                    vmem_limit_bytes=None):
    """x: (B, S, D) f32. params = prepare_decoder_params(w_stack, b_stack).
    Returns LayerNorm_custom(layers(x)) with residual-Linear stand-in layers."""
    w_p, b_p, mask, D = params
    B, S, Dx = x.shape
    assert Dx == D, "hidden size mismatch between x and prepared params"
    L, _, Dp = b_p.shape
    rows = B * S

    # Row tile: multiple of 8; guarantee >= 2 grid steps when possible so
    # dimension_semantics=('parallel',) can shard tiles across v7x's 2 TCs.
    rt = min(row_tile, _round_up(rows, 8))
    if rows > 8 and _round_up(rows, rt) // rt < 2:
        rt = _round_up(-(-rows // 2), 8)
    rows_p = _round_up(rows, rt)
    n_row_tiles = rows_p // rt
    needs_mask = Dp != D

    # Activation pad only when needed (skip the extra HBM round trip when the
    # shapes are already aligned; the reshape itself is free).
    x2 = x.reshape(rows, D)
    padded = (rows_p != rows) or (Dp != D)
    if padded:
        x2 = jnp.zeros((rows_p, Dp), x.dtype).at[:rows, :D].set(x2)

    if mode == "auto":
        mode = "resident" if L * Dp * Dp * 2 <= _RESIDENT_WEIGHT_BUDGET else "stream"

    io_bytes = 2 * 2 * rt * Dp * 4            # double-buffered in + out tiles
    small = 4 * Dp * 4 + 4096                 # mask / alpha / beta slack
    flops = 2 * rows_p * Dp * Dp * L
    if mode == "resident":
        weight_hbm = L * Dp * Dp * 2
        vmem_needed = L * Dp * Dp * 2 + L * Dp * 4 + io_bytes + small
    else:
        weight_hbm = n_row_tiles * L * Dp * Dp * 2
        vmem_needed = 2 * Dp * Dp * 2 + 2 * Dp * 4 + io_bytes + rt * Dp * 4 + small

    if vmem_limit_bytes is None:
        vmem_limit_bytes = min(max(vmem_needed + (4 << 20), 16 << 20), 128 << 20)

    cost = pl.CostEstimate(
        flops=flops,
        transcendentals=2 * rows_p,            # sqrt + rsqrt per row
        bytes_accessed=2 * rows_p * Dp * 4 + weight_hbm + L * Dp * 4,
    )
    out_shape = jax.ShapeDtypeStruct((rows_p, Dp), x.dtype)

    def invoke(single_buffer_invariants):
        inv = ({"pipeline_mode": pl.Buffered(1)}
               if single_buffer_invariants else {})
        if mode == "resident":
            grid_spec = pltpu.PrefetchScalarGridSpec(
                num_scalar_prefetch=0,
                grid=(n_row_tiles,),
                in_specs=[
                    pl.BlockSpec(memory_space=pltpu.MemorySpace.SMEM),     # alpha
                    pl.BlockSpec(memory_space=pltpu.MemorySpace.SMEM),     # beta
                    pl.BlockSpec((1, Dp), lambda i: (0, 0), **inv),        # lane mask
                    pl.BlockSpec((rt, Dp), lambda i: (i, 0)),              # x tile
                    pl.BlockSpec((L, Dp, Dp), lambda i: (0, 0, 0), **inv),  # weights
                    pl.BlockSpec((L, 1, Dp), lambda i: (0, 0, 0), **inv),   # biases
                ],
                out_specs=pl.BlockSpec((rt, Dp), lambda i: (i, 0)),
            )
            kern = functools.partial(_resident_kernel, D, needs_mask)
            dims = ("parallel",)
        else:
            grid_spec = pltpu.PrefetchScalarGridSpec(
                num_scalar_prefetch=0,
                grid=(n_row_tiles, L),
                in_specs=[
                    pl.BlockSpec(memory_space=pltpu.MemorySpace.SMEM),     # alpha
                    pl.BlockSpec(memory_space=pltpu.MemorySpace.SMEM),     # beta
                    pl.BlockSpec((1, Dp), lambda i, l: (0, 0), **inv),     # lane mask
                    pl.BlockSpec((rt, Dp), lambda i, l: (i, 0)),           # x tile
                    pl.BlockSpec((1, Dp, Dp), lambda i, l: (l, 0, 0)),     # W_l stream
                    pl.BlockSpec((1, 1, Dp), lambda i, l: (l, 0, 0)),      # b_l stream
                ],
                out_specs=pl.BlockSpec((rt, Dp), lambda i, l: (i, 0)),
                scratch_shapes=[pltpu.VMEM((rt, Dp), jnp.float32)],        # h acc
            )
            kern = functools.partial(_stream_kernel, D, needs_mask)
            dims = ("parallel", "arbitrary")

        return pl.pallas_call(
            kern,
            out_shape=out_shape,
            grid_spec=grid_spec,
            compiler_params=pltpu.CompilerParams(
                dimension_semantics=dims,
                vmem_limit_bytes=int(vmem_limit_bytes)),
            cost_estimate=cost,
        )(alpha, beta, mask, x2, w_p, b_p)

    try:
        out = invoke(True)
    except Exception:  # pragma: no cover — fall back if Buffered(1) unsupported
        out = invoke(False)

    if padded:
        out = out[:rows, :D]
    return out.reshape(B, S, D)


def _reference(x, w_stack, b_stack, alpha, beta):
    h = x.astype(jnp.float32)
    L = w_stack.shape[0]
    for l in range(L):
        s = jnp.einsum("bsd,de->bse",
                       h.astype(jnp.bfloat16),
                       w_stack[l].astype(jnp.bfloat16),
                       preferred_element_type=jnp.float32)
        h = h + s + b_stack[l].astype(jnp.float32)
    D = h.shape[-1]
    mean = jnp.mean(h, axis=-1, keepdims=True)
    std = jnp.sqrt(jnp.sum((h - mean) ** 2, axis=-1, keepdims=True) / (D - 1))
    norm = (h - mean) / jnp.sqrt(std + EPS)
    return norm * beta[0] + alpha[0]


if __name__ == "__main__":
    key = jax.random.PRNGKey(0)

    def make_inputs(case, B, S, D, L):
        kx, kw, kb = jax.random.split(jax.random.fold_in(key, case), 3)
        x = jax.random.normal(kx, (B, S, D), dtype=jnp.float32)
        w = jax.random.normal(kw, (L, D, D), dtype=jnp.float32) * (0.5 / jnp.sqrt(D))
        b = jax.random.normal(kb, (L, D), dtype=jnp.float32) * 0.01
        return x, w, b

    # LayerNorm params per module __init__: alpha = zeros(1), beta = ones(1)
    alpha = jnp.zeros((1,), dtype=jnp.float32)
    beta = jnp.ones((1,), dtype=jnp.float32)

    cases = [
        # (B, S, D,   L, mode)
        (2, 8, 32, 2, "auto"),     # resident path, unrolled layers, lane padding
        (2, 8, 32, 2, "stream"),   # weight-streaming path (v7x-style)
        (2, 8, 128, 6, "auto"),    # resident path, fori layer loop, no padding
    ]
    for ci, (B, S, D, L, mode) in enumerate(cases):
        x, w, b = make_inputs(ci, B, S, D, L)
        params = prepare_decoder_params(w, b)     # once per model, not per call
        out = decoder_forward(x, params, alpha, beta, mode=mode)
        out = jax.block_until_ready(out)
        ref = _reference(x, w, b, alpha, beta)
        assert out.shape == (B, S, D)
        # tolerance reflects bf16 matmul operands (f32 accumulation / LN stats)
        assert jnp.allclose(out, ref, atol=3e-2, rtol=3e-2), f"mismatch (case {ci})"

    print("KERNEL_OK")
</pallas_src>

<mosaic_0001>
module attributes {stable_mosaic.version = 11 : i64} {
  func.func @_resident_kernel(%arg0: i32, %arg1: memref<1xf32, #tpu.memory_space<smem>>, %arg2: memref<1xf32, #tpu.memory_space<smem>>, %arg3: memref<1x128xf32, #tpu.memory_space<vmem>>, %arg4: memref<8x128xf32, #tpu.memory_space<vmem>>, %arg5: memref<2x128x128xbf16, #tpu.memory_space<vmem>>, %arg6: memref<2x1x128xf32, #tpu.memory_space<vmem>>, %arg7: memref<8x128xf32, #tpu.memory_space<vmem>>) attributes {dimension_semantics = [#tpu.dimension_semantics<parallel>], iteration_bounds = array<i64: 2>, scalar_prefetch = 0 : i64, scratch_operands = 0 : i64, tpu.core_type = #tpu.core_type<tc>, window_params = [{transform_indices = @transform_0, window_bounds = array<i64: 1>}, {transform_indices = @transform_1, window_bounds = array<i64: 1>}, {pipeline_mode = #tpu.pipeline_mode<synchronous>, transform_indices = @transform_2, window_bounds = array<i64: 1, 128>}, {transform_indices = @transform_3, window_bounds = array<i64: 8, 128>}, {pipeline_mode = #tpu.pipeline_mode<synchronous>, transform_indices = @transform_4, window_bounds = array<i64: 2, 128, 128>}, {pipeline_mode = #tpu.pipeline_mode<synchronous>, transform_indices = @transform_5, window_bounds = array<i64: 2, 1, 128>}, {transform_indices = @transform_6, window_bounds = array<i64: 8, 128>}]} {
    %c0 = arith.constant 0 : index
    %c0_0 = arith.constant 0 : index
    %0 = vector.load %arg4[%c0, %c0_0] : memref<8x128xf32, #tpu.memory_space<vmem>>, vector<8x128xf32>
    %1 = arith.truncf %0 : vector<8x128xf32> to vector<8x128xbf16>
    %c0_1 = arith.constant 0 : index
    %c0_2 = arith.constant 0 : index
    %c0_3 = arith.constant 0 : index
    %2 = vector.load %arg5[%c0_1, %c0_2, %c0_3] : memref<2x128x128xbf16, #tpu.memory_space<vmem>>, vector<1x128x128xbf16>
    %3 = vector.shape_cast %2 : vector<1x128x128xbf16> to vector<128x128xbf16>
    %cst = arith.constant dense<0.000000e+00> : vector<8x128xf32>
    %4 = tpu.matmul %1, %3, %cst {dimension_numbers = #tpu.dot_dimension_numbers<[1], [0], [0], [1], [0, 0, 1, 1], [], []>} : vector<8x128xbf16>, vector<128x128xbf16>, vector<8x128xf32> -> vector<8x128xf32>
    %5 = arith.addf %0, %4 : vector<8x128xf32>
    %c0_4 = arith.constant 0 : index
    %c0_5 = arith.constant 0 : index
    %c0_6 = arith.constant 0 : index
    %6 = vector.load %arg6[%c0_4, %c0_5, %c0_6] : memref<2x1x128xf32, #tpu.memory_space<vmem>>, vector<1x1x128xf32>
    %7 = vector.shape_cast %6 : vector<1x1x128xf32> to vector<1x128xf32>
    %8 = vector.broadcast %7 : vector<1x128xf32> to vector<8x128xf32>
    %9 = arith.addf %5, %8 : vector<8x128xf32>
    %10 = arith.truncf %9 : vector<8x128xf32> to vector<8x128xbf16>
    %c1 = arith.constant 1 : index
    %c0_7 = arith.constant 0 : index
    %c0_8 = arith.constant 0 : index
    %11 = vector.load %arg5[%c1, %c0_7, %c0_8] : memref<2x128x128xbf16, #tpu.memory_space<vmem>>, vector<1x128x128xbf16>
    %12 = vector.shape_cast %11 : vector<1x128x128xbf16> to vector<128x128xbf16>
    %cst_9 = arith.constant dense<0.000000e+00> : vector<8x128xf32>
    %13 = tpu.matmul %10, %12, %cst_9 {dimension_numbers = #tpu.dot_dimension_numbers<[1], [0], [0], [1], [0, 0, 1, 1], [], []>} : vector<8x128xbf16>, vector<128x128xbf16>, vector<8x128xf32> -> vector<8x128xf32>
    %14 = arith.addf %9, %13 : vector<8x128xf32>
    %c1_10 = arith.constant 1 : index
    %c0_11 = arith.constant 0 : index
    %c0_12 = arith.constant 0 : index
    %15 = vector.load %arg6[%c1_10, %c0_11, %c0_12] : memref<2x1x128xf32, #tpu.memory_space<vmem>>, vector<1x1x128xf32>
    %16 = vector.shape_cast %15 : vector<1x1x128xf32> to vector<1x128xf32>
    %17 = vector.broadcast %16 : vector<1x128xf32> to vector<8x128xf32>
    %18 = arith.addf %14, %17 : vector<8x128xf32>
    %cst_13 = arith.constant dense<0.000000e+00> : vector<8xf32>
    %19 = vector.multi_reduction <add>, %18, %cst_13 [1] : vector<8x128xf32> to vector<8xf32>
    %20 = vector.shape_cast %19 : vector<8xf32> to vector<8x1xf32>
    %cst_14 = arith.constant 3.125000e-02 : f32
    %21 = vector.broadcast %cst_14 : f32 to vector<8x1xf32>
    %22 = arith.mulf %20, %21 : vector<8x1xf32>
    %23 = vector.broadcast %22 : vector<8x1xf32> to vector<8x128xf32>
    %24 = arith.subf %18, %23 : vector<8x128xf32>
    %c0_15 = arith.constant 0 : index
    %c0_16 = arith.constant 0 : index
    %25 = vector.load %arg3[%c0_15, %c0_16] : memref<1x128xf32, #tpu.memory_space<vmem>>, vector<1x128xf32>
    %26 = vector.broadcast %25 : vector<1x128xf32> to vector<8x128xf32>
    %27 = arith.mulf %24, %26 : vector<8x128xf32>
    %28 = arith.mulf %27, %27 : vector<8x128xf32>
    %cst_17 = arith.constant dense<0.000000e+00> : vector<8xf32>
    %29 = vector.multi_reduction <add>, %28, %cst_17 [1] : vector<8x128xf32> to vector<8xf32>
    %30 = vector.shape_cast %29 : vector<8xf32> to vector<8x1xf32>
    %cst_18 = arith.constant 0.0322580636 : f32
    %31 = vector.broadcast %cst_18 : f32 to vector<8x1xf32>
    %32 = arith.mulf %30, %31 : vector<8x1xf32>
    %33 = math.sqrt %32 : vector<8x1xf32>
    %cst_19 = arith.constant 9.99999997E-7 : f32
    %34 = vector.broadcast %cst_19 : f32 to vector<8x1xf32>
    %35 = arith.addf %33, %34 : vector<8x1xf32>
    %36 = math.rsqrt %35 : vector<8x1xf32>
    %c0_20 = arith.constant 0 : index
    %37 = memref.load %arg2[%c0_20] : memref<1xf32, #tpu.memory_space<smem>>
    %38 = vector.broadcast %37 : f32 to vector<8x1xf32>
    %39 = arith.mulf %36, %38 : vector<8x1xf32>
    %40 = vector.broadcast %39 : vector<8x1xf32> to vector<8x128xf32>
    %41 = arith.mulf %24, %40 : vector<8x128xf32>
    %c0_21 = arith.constant 0 : index
    %42 = memref.load %arg1[%c0_21] : memref<1xf32, #tpu.memory_space<smem>>
    %43 = vector.broadcast %42 : f32 to vector<8x128xf32>
    %44 = arith.addf %41, %43 : vector<8x128xf32>
    %c0_22 = arith.constant 0 : index
    %c0_23 = arith.constant 0 : index
    %45 = vector.load %arg7[%c0_22, %c0_23] : memref<8x128xf32, #tpu.memory_space<vmem>>, vector<8x128xf32>
    tpu.vector_store %arg7[%c0_22, %c0_23], %44 {strides = array<i32>} : memref<8x128xf32, #tpu.memory_space<vmem>>, vector<8x128xf32>,
    return
  }
  func.func @transform_0(%arg0: i32) -> i32 {
    %c0_i32 = arith.constant 0 : i32
    %c0_i32_0 = arith.constant 0 : i32
    return %c0_i32 : i32
  }
  func.func @transform_1(%arg0: i32) -> i32 {
    %c0_i32 = arith.constant 0 : i32
    %c0_i32_0 = arith.constant 0 : i32
    return %c0_i32 : i32
  }
  func.func @transform_2(%arg0: i32) -> (i32, i32) {
    %c0_i32 = arith.constant 0 : i32
    %c0_i32_0 = arith.constant 0 : i32
    %c0_i32_1 = arith.constant 0 : i32
    return %c0_i32, %c0_i32_0 : i32, i32
  }
  func.func @transform_3(%arg0: i32) -> (i32, i32) {
    %c0_i32 = arith.constant 0 : i32
    %c0_i32_0 = arith.constant 0 : i32
    return %arg0, %c0_i32 : i32, i32
  }
  func.func @transform_4(%arg0: i32) -> (i32, i32, i32) {
    %c0_i32 = arith.constant 0 : i32
    %c0_i32_0 = arith.constant 0 : i32
    %c0_i32_1 = arith.constant 0 : i32
    %c0_i32_2 = arith.constant 0 : i32
    return %c0_i32, %c0_i32_0, %c0_i32_1 : i32, i32, i32
  }
  func.func @transform_5(%arg0: i32) -> (i32, i32, i32) {
    %c0_i32 = arith.constant 0 : i32
    %c0_i32_0 = arith.constant 0 : i32
    %c0_i32_1 = arith.constant 0 : i32
    %c0_i32_2 = arith.constant 0 : i32
    return %c0_i32, %c0_i32_0, %c0_i32_1 : i32, i32, i32
  }
  func.func @transform_6(%arg0: i32) -> (i32, i32) {
    %c0_i32 = arith.constant 0 : i32
    %c0_i32_0 = arith.constant 0 : i32
    return %arg0, %c0_i32 : i32, i32
  }
}

module attributes {stable_mosaic.version = 11 : i64} {
  func.func @_resident_kernel(%arg0: i32, %arg1: memref<1xf32, #tpu.memory_space<smem>>, %arg2: memref<1xf32, #tpu.memory_space<smem>>, %arg3: memref<1x128xf32, #tpu.memory_space<vmem>>, %arg4: memref<8x128xf32, #tpu.memory_space<vmem>>, %arg5: memref<2x128x128xbf16, #tpu.memory_space<vmem>>, %arg6: memref<2x1x128xf32, #tpu.memory_space<vmem>>, %arg7: memref<8x128xf32, #tpu.memory_space<vmem>>) attributes {dimension_semantics = [#tpu.dimension_semantics<parallel>], iteration_bounds = array<i64: 2>, scalar_prefetch = 0 : i64, scratch_operands = 0 : i64, tpu.core_type = #tpu.core_type<tc>, window_params = [{transform_indices = @transform_0, window_bounds = array<i64: 1>}, {transform_indices = @transform_1, window_bounds = array<i64: 1>}, {pipeline_mode = #tpu.pipeline_mode<synchronous>, transform_indices = @transform_2, window_bounds = array<i64: 1, 128>}, {transform_indices = @transform_3, window_bounds = array<i64: 8, 128>}, {pipeline_mode = #tpu.pipeline_mode<synchronous>, transform_indices = @transform_4, window_bounds = array<i64: 2, 128, 128>}, {pipeline_mode = #tpu.pipeline_mode<synchronous>, transform_indices = @transform_5, window_bounds = array<i64: 2, 1, 128>}, {transform_indices = @transform_6, window_bounds = array<i64: 8, 128>}]} {
    %c0 = arith.constant 0 : index
    %c0_0 = arith.constant 0 : index
    %0 = vector.load %arg4[%c0, %c0_0] : memref<8x128xf32, #tpu.memory_space<vmem>>, vector<8x128xf32>
    %1 = arith.truncf %0 : vector<8x128xf32> to vector<8x128xbf16>
    %c0_1 = arith.constant 0 : index
    %c0_2 = arith.constant 0 : index
    %c0_3 = arith.constant 0 : index
    %2 = vector.load %arg5[%c0_1, %c0_2, %c0_3] : memref<2x128x128xbf16, #tpu.memory_space<vmem>>, vector<1x128x128xbf16>
    %3 = vector.shape_cast %2 : vector<1x128x128xbf16> to vector<128x128xbf16>
    %cst = arith.constant dense<0.000000e+00> : vector<8x128xf32>
    %4 = tpu.matmul %1, %3, %cst {dimension_numbers = #tpu.dot_dimension_numbers<[1], [0], [0], [1], [0, 0, 1, 1], [], []>} : vector<8x128xbf16>, vector<128x128xbf16>, vector<8x128xf32> -> vector<8x128xf32>
    %5 = arith.addf %0, %4 : vector<8x128xf32>
    %c0_4 = arith.constant 0 : index
    %c0_5 = arith.constant 0 : index
    %c0_6 = arith.constant 0 : index
    %6 = vector.load %arg6[%c0_4, %c0_5, %c0_6] : memref<2x1x128xf32, #tpu.memory_space<vmem>>, vector<1x1x128xf32>
    %7 = vector.shape_cast %6 : vector<1x1x128xf32> to vector<1x128xf32>
    %8 = vector.broadcast %7 : vector<1x128xf32> to vector<8x128xf32>
    %9 = arith.addf %5, %8 : vector<8x128xf32>
    %10 = arith.truncf %9 : vector<8x128xf32> to vector<8x128xbf16>
    %c1 = arith.constant 1 : index
    %c0_7 = arith.constant 0 : index
    %c0_8 = arith.constant 0 : index
    %11 = vector.load %arg5[%c1, %c0_7, %c0_8] : memref<2x128x128xbf16, #tpu.memory_space<vmem>>, vector<1x128x128xbf16>
    %12 = vector.shape_cast %11 : vector<1x128x128xbf16> to vector<128x128xbf16>
    %cst_9 = arith.constant dense<0.000000e+00> : vector<8x128xf32>
    %13 = tpu.matmul %10, %12, %cst_9 {dimension_numbers = #tpu.dot_dimension_numbers<[1], [0], [0], [1], [0, 0, 1, 1], [], []>} : vector<8x128xbf16>, vector<128x128xbf16>, vector<8x128xf32> -> vector<8x128xf32>
    %14 = arith.addf %9, %13 : vector<8x128xf32>
    %c1_10 = arith.constant 1 : index
    %c0_11 = arith.constant 0 : index
    %c0_12 = arith.constant 0 : index
    %15 = vector.load %arg6[%c1_10, %c0_11, %c0_12] : memref<2x1x128xf32, #tpu.memory_space<vmem>>, vector<1x1x128xf32>
    %16 = vector.shape_cast %15 : vector<1x1x128xf32> to vector<1x128xf32>
    %17 = vector.broadcast %16 : vector<1x128xf32> to vector<8x128xf32>
    %18 = arith.addf %14, %17 : vector<8x128xf32>
    %cst_13 = arith.constant dense<0.000000e+00> : vector<8xf32>
    %19 = vector.multi_reduction <add>, %18, %cst_13 [1] : vector<8x128xf32> to vector<8xf32>
    %20 = vector.shape_cast %19 : vector<8xf32> to vector<8x1xf32>
    %cst_14 = arith.constant 3.125000e-02 : f32
    %21 = vector.broadcast %cst_14 : f32 to vector<8x1xf32>
    %22 = arith.mulf %20, %21 : vector<8x1xf32>
    %23 = vector.broadcast %22 : vector<8x1xf32> to vector<8x128xf32>
    %24 = arith.subf %18, %23 : vector<8x128xf32>
    %c0_15 = arith.constant 0 : index
    %c0_16 = arith.constant 0 : index
    %25 = vector.load %arg3[%c0_15, %c0_16] : memref<1x128xf32, #tpu.memory_space<vmem>>, vector<1x128xf32>
    %26 = vector.broadcast %25 : vector<1x128xf32> to vector<8x128xf32>
    %27 = arith.mulf %24, %26 : vector<8x128xf32>
    %28 = arith.mulf %27, %27 : vector<8x128xf32>
    %cst_17 = arith.constant dense<0.000000e+00> : vector<8xf32>
    %29 = vector.multi_reduction <add>, %28, %cst_17 [1] : vector<8x128xf32> to vector<8xf32>
    %30 = vector.shape_cast %29 : vector<8xf32> to vector<8x1xf32>
    %cst_18 = arith.constant 0.0322580636 : f32
    %31 = vector.broadcast %cst_18 : f32 to vector<8x1xf32>
    %32 = arith.mulf %30, %31 : vector<8x1xf32>
    %33 = math.sqrt %32 : vector<8x1xf32>
    %cst_19 = arith.constant 9.99999997E-7 : f32
    %34 = vector.broadcast %cst_19 : f32 to vector<8x1xf32>
    %35 = arith.addf %33, %34 : vector<8x1xf32>
    %36 = math.rsqrt %35 : vector<8x1xf32>
    %c0_20 = arith.constant 0 : index
    %37 = memref.load %arg2[%c0_20] : memref<1xf32, #tpu.memory_space<smem>>
    %38 = vector.broadcast %37 : f32 to vector<8x1xf32>
    %39 = arith.mulf %36, %38 : vector<8x1xf32>
    %40 = vector.broadcast %39 : vector<8x1xf32> to vector<8x128xf32>
    %41 = arith.mulf %24, %40 : vector<8x128xf32>
    %c0_21 = arith.constant 0 : index
    %42 = memref.load %arg1[%c0_21] : memref<1xf32, #tpu.memory_space<smem>>
    %43 = vector.broadcast %42 : f32 to vector<8x128xf32>
    %44 = arith.addf %41, %43 : vector<8x128xf32>
    %c0_22 = arith.constant 0 : index
    %c0_23 = arith.constant 0 : index
    %45 = vector.load %arg7[%c0_22, %c0_23] : memref<8x128xf32, #tpu.memory_space<vmem>>, vector<8x128xf32>
    tpu.vector_store %arg7[%c0_22, %c0_23], %44 {strides = array<i32>} : memref<8x128xf32, #tpu.memory_space<vmem>>, vector<8x128xf32>,
    return
  }
  func.func @transform_0(%arg0: i32) -> i32 {
    %c0_i32 = arith.constant 0 : i32
    %c0_i32_0 = arith.constant 0 : i32
    return %c0_i32 : i32
  }
  func.func @transform_1(%arg0: i32) -> i32 {
    %c0_i32 = arith.constant 0 : i32
    %c0_i32_0 = arith.constant 0 : i32
    return %c0_i32 : i32
  }
  func.func @transform_2(%arg0: i32) -> (i32, i32) {
    %c0_i32 = arith.constant 0 : i32
    %c0_i32_0 = arith.constant 0 : i32
    %c0_i32_1 = arith.constant 0 : i32
    return %c0_i32, %c0_i32_0 : i32, i32
  }
  func.func @transform_3(%arg0: i32) -> (i32, i32) {
    %c0_i32 = arith.constant 0 : i32
    %c0_i32_0 = arith.constant 0 : i32
    return %arg0, %c0_i32 : i32, i32
  }
  func.func @transform_4(%arg0: i32) -> (i32, i32, i32) {
    %c0_i32 = arith.constant 0 : i32
    %c0_i32_0 = arith.constant 0 : i32
    %c0_i32_1 = arith.constant 0 : i32
    %c0_i32_2 = arith.constant 0 : i32
    return %c0_i32, %c0_i32_0, %c0_i32_1 : i32, i32, i32
  }
  func.func @transform_5(%arg0: i32) -> (i32, i32, i32) {
    %c0_i32 = arith.constant 0 : i32
    %c0_i32_0 = arith.constant 0 : i32
    %c0_i32_1 = arith.constant 0 : i32
    %c0_i32_2 = arith.constant 0 : i32
    return %c0_i32, %c0_i32_0, %c0_i32_1 : i32, i32, i32
  }
  func.func @transform_6(%arg0: i32) -> (i32, i32) {
    %c0_i32 = arith.constant 0 : i32
    %c0_i32_0 = arith.constant 0 : i32
    return %arg0, %c0_i32 : i32, i32
  }
}

</mosaic_0001>

<llo_original>
// kernel: tpu_custom_call.1
$region0: #{tpu_custom_call.1}
  #allocation0 [shape = 'u32[]', space=smem, size = 0x4, offset = 0x4, fixed_abs, tag = 'smem constant byte address 0x4 - core index']
  #allocation1 [shape = 'u32[144,128]{1,0:T(1,128)}', space=vmem, size = 0x12000, scoped, tag = 'internal scratch']
  #allocation2 [shape = 'f32[1]{0:T(128)S(6)}', space=smem, size = 0x200, scoped, tag = 'scoped memory for tpu_custom_call.1']
  #allocation3 [shape = 'f32[1]{0:T(128)S(6)}', space=smem, size = 0x200, scoped, tag = 'scoped memory for tpu_custom_call.1']
  %s0 = inlined_call_operand.<no memory space> [shape: f32[1], index: 0, kind: input, shape index: {}]
  %s1 = inlined_call_operand.<no memory space> [shape: f32[1], index: 1, kind: input, shape index: {}]
  %s2 = inlined_call_operand.vmem [shape: f32[1,128], index: 2, kind: input, shape index: {}]
  %s3 = inlined_call_operand.hbm [shape: f32[16,128], index: 3, kind: input, shape index: {}]
  %s4 = inlined_call_operand.hbm [shape: bf16[2,128,128], index: 4, kind: input, shape index: {}]
  %s5 = inlined_call_operand.vmem [shape: f32[2,1,128], index: 5, kind: input, shape index: {}]
  %s6 = inlined_call_operand.hbm [shape: f32[16,128], index: 6, kind: output, shape index: {}]
  %s7 = sld [smem:[#allocation0]]
  $region65: #{tpu_custom_call.1} parent=0
    _
  %s9 = ssub.s32 1, %s7
  %s10 = scalar_select 0, %s9, %s7
  %11 = sst [smem:[#allocation2]] %s0
  %12 = sst [smem:[#allocation3]] %s1
  $region1: #{tpu_custom_call.1} parent=0
    #allocation4 [shape = 'u8[8192]{0}', space=vmem, size = 0x2000, scoped, tag = 'input window, operand 3']
    #allocation5 [shape = 's32[2]{0}', space=sflag, size = 0x8, scoped, tag = 'scoped memory for tpu_custom_call.1']
    #allocation6 [shape = 's32[2]{0}', space=sflag, size = 0x8, scoped, tag = 'scoped memory for tpu_custom_call.1']
    #allocation7 [shape = 'u8[65536]{0}', space=vmem, size = 0x10000, scoped, tag = 'input window, operand 4, single buffered']
    #allocation8 [shape = 's32[1]{0}', space=sflag, size = 0x4, scoped, tag = 'scoped memory for tpu_custom_call.1']
    #allocation9 [shape = 'u8[8192]{0}', space=vmem, size = 0x2000, scoped, tag = 'output window, operand 0']
    %13 = vsyncpa [#allocation5], 0
    %s14 = scalar_lea.sflag [#allocation5], 1
    %15 = vsyncpa %s14, 0
    %16 = vsyncpa [#allocation8], 0
    %17 = vsyncpa [#allocation6], 0
    %s18 = scalar_lea.sflag [#allocation6], 1
    %19 = vsyncpa %s18, 0
    loop: start=0, step=1, limit=4
    $region2: #{tpu_custom_call.1} parent=1 // loop_pre_header
      _
    $region3: #{tpu_custom_call.1} parent=1 // loop_header
      %s21 = sphi 0, %s25
      %p22 = scmp.ge.s32.totalorder %s21, 4
      %s29 = sphi 0, %s29
      %s31 = sphi 0, %s29
      %s32 = sphi 0, %s31
      %s46 = sphi 0, %s32
      %s50 = sphi 0, %s50
      %s52 = sphi 0, %s50
      %s53 = sphi 0, %s52
      %s67 = sphi 0, %s53
      %s71 = sphi 0, %s71
      %s73 = sphi 0, %s71
      %s74 = sphi 0, %s73
      %s88 = sphi 0, %s74
      %s94 = sphi 0, %s96
      %s97 = sphi 0, %s94
      %s98 = sphi 0, %s97
      %s114 = sphi 0, %s98
      %s118 = sphi 0, %s118
      %s120 = sphi 0, %s118
      %s121 = sphi 0, %s120
      %s135 = sphi 0, %s121
      %s139 = sphi 0, %s139
      %s141 = sphi 0, %s139
      %s142 = sphi 0, %s141
      %s156 = sphi 0, %s142
      %s162 = sphi 0, %s164
      %s165 = sphi 0, %s162
      %s166 = sphi 0, %s165
      %s182 = sphi 0, %s166
    $region4: #{tpu_custom_call.1} parent=1 // loop_header_branch
      %24 = sbr.rel (%p22) target = $region8
    $region5: #{tpu_custom_call.1} parent=1 // loop_body
      %s26 = ssub.s32 %s21, 1
      %s27 = ssub.s32 %s21, 2
      %s28 = sadd.s32 %s21, 1
      %s30 = sadd.s32 %s29, 1
      %p33 = scmp.eq.s32.totalorder %s21, 1
      %p34 = scmp.ne.s32.totalorder %s29, %s31
      %p35 = scmp.eq.s32.totalorder %s21, 0
      %p36 = por %p34, %p35
      %p37 = scmp.ne.s32.totalorder %s29, %s31
      %p38 = scmp.eq.s32.totalorder %s26, 1
      %p39 = por %p37, %p38
      %p40 = scmp.ne.s32.totalorder %s31, %s32
      %p41 = scmp.eq.s32.totalorder %s26, 0
      %p42 = por %p40, %p41
      %p43 = scmp.ne.s32.totalorder %s31, %s32
      %p44 = scmp.eq.s32.totalorder %s27, 1
      %p45 = por %p43, %p44
      %p47 = scmp.ne.s32.totalorder %s32, %s46
      %p48 = scmp.eq.s32.totalorder %s27, 0
      %p49 = por %p47, %p48
      %s51 = sadd.s32 %s50, 1
      %p54 = scmp.eq.s32.totalorder %s21, 1
      %p55 = scmp.ne.s32.totalorder %s50, %s52
      %p56 = scmp.eq.s32.totalorder %s21, 0
      %p57 = por %p55, %p56
      %p58 = scmp.ne.s32.totalorder %s50, %s52
      %p59 = scmp.eq.s32.totalorder %s26, 1
      %p60 = por %p58, %p59
      %p61 = scmp.ne.s32.totalorder %s52, %s53
      %p62 = scmp.eq.s32.totalorder %s26, 0
      %p63 = por %p61, %p62
      %p64 = scmp.ne.s32.totalorder %s52, %s53
      %p65 = scmp.eq.s32.totalorder %s27, 1
      %p66 = por %p64, %p65
      %p68 = scmp.ne.s32.totalorder %s53, %s67
      %p69 = scmp.eq.s32.totalorder %s27, 0
      %p70 = por %p68, %p69
      %s72 = sadd.s32 %s71, 1
      %p75 = scmp.eq.s32.totalorder %s21, 1
      %p76 = scmp.ne.s32.totalorder %s71, %s73
      %p77 = scmp.eq.s32.totalorder %s21, 0
      %p78 = por %p76, %p77
      %p79 = scmp.ne.s32.totalorder %s71, %s73
      %p80 = scmp.eq.s32.totalorder %s26, 1
      %p81 = por %p79, %p80
      %p82 = scmp.ne.s32.totalorder %s73, %s74
      %p83 = scmp.eq.s32.totalorder %s26, 0
      %p84 = por %p82, %p83
      %p85 = scmp.ne.s32.totalorder %s73, %s74
      %p86 = scmp.eq.s32.totalorder %s27, 1
      %p87 = por %p85, %p86
      %p89 = scmp.ne.s32.totalorder %s74, %s88
      %p90 = scmp.eq.s32.totalorder %s27, 0
      %p91 = por %p89, %p90
      %s92 = ssub.s32 %s21, %s28
      %p93 = scmp.eq.s32.totalorder %s92, 0
      %s95 = sadd.s32 %s94, 1
      %s96 = scalar_select %p93, %s94, %s95
      %p99 = pneg %p93
      %p100 = scmp.eq.s32.totalorder %s21, 1
      %p101 = por %p99, %p100
      %p102 = scmp.ne.s32.totalorder %s94, %s97
      %p103 = scmp.eq.s32.totalorder %s21, 0
      %p104 = por %p102, %p103
      %p105 = scmp.ne.s32.totalorder %s94, %s97
      %p106 = scmp.eq.s32.totalorder %s26, 1
      %p107 = por %p105, %p106
      %p108 = scmp.ne.s32.totalorder %s97, %s98
      %p109 = scmp.eq.s32.totalorder %s26, 0
      %p110 = por %p108, %p109
      %p111 = scmp.ne.s32.totalorder %s97, %s98
      %p112 = scmp.eq.s32.totalorder %s27, 1
      %p113 = por %p111, %p112
      %p115 = scmp.ne.s32.totalorder %s98, %s114
      %p116 = scmp.eq.s32.totalorder %s27, 0
      %p117 = por %p115, %p116
      %s119 = sadd.s32 %s118, 1
      %p122 = scmp.eq.s32.totalorder %s21, 1
      %p123 = scmp.ne.s32.totalorder %s118, %s120
      %p124 = scmp.eq.s32.totalorder %s21, 0
      %p125 = por %p123, %p124
      %p126 = scmp.ne.s32.totalorder %s118, %s120
      %p127 = scmp.eq.s32.totalorder %s26, 1
      %p128 = por %p126, %p127
      %p129 = scmp.ne.s32.totalorder %s120, %s121
      %p130 = scmp.eq.s32.totalorder %s26, 0
      %p131 = por %p129, %p130
      %p132 = scmp.ne.s32.totalorder %s120, %s121
      %p133 = scmp.eq.s32.totalorder %s27, 1
      %p134 = por %p132, %p133
      %p136 = scmp.ne.s32.totalorder %s121, %s135
      %p137 = scmp.eq.s32.totalorder %s27, 0
      %p138 = por %p136, %p137
      %s140 = sadd.s32 %s139, 1
      %p143 = scmp.eq.s32.totalorder %s21, 1
      %p144 = scmp.ne.s32.totalorder %s139, %s141
      %p145 = scmp.eq.s32.totalorder %s21, 0
      %p146 = por %p144, %p145
      %p147 = scmp.ne.s32.totalorder %s139, %s141
      %p148 = scmp.eq.s32.totalorder %s26, 1
      %p149 = por %p147, %p148
      %p150 = scmp.ne.s32.totalorder %s141, %s142
      %p151 = scmp.eq.s32.totalorder %s26, 0
      %p152 = por %p150, %p151
      %p153 = scmp.ne.s32.totalorder %s141, %s142
      %p154 = scmp.eq.s32.totalorder %s27, 1
      %p155 = por %p153, %p154
      %p157 = scmp.ne.s32.totalorder %s142, %s156
      %p158 = scmp.eq.s32.totalorder %s27, 0
      %p159 = por %p157, %p158
      %s160 = ssub.s32 %s21, %s28
      %p161 = scmp.eq.s32.totalorder %s160, 0
      %s163 = sadd.s32 %s162, 1
      %s164 = scalar_select %p161, %s162, %s163
      %p167 = pneg %p161
      %p168 = scmp.eq.s32.totalorder %s21, 1
      %p169 = por %p167, %p168
      %p170 = scmp.ne.s32.totalorder %s162, %s165
      %p171 = scmp.eq.s32.totalorder %s21, 0
      %p172 = por %p170, %p171
      %p173 = scmp.ne.s32.totalorder %s162, %s165
      %p174 = scmp.eq.s32.totalorder %s26, 1
      %p175 = por %p173, %p174
      %p176 = scmp.ne.s32.totalorder %s165, %s166
      %p177 = scmp.eq.s32.totalorder %s26, 0
      %p178 = por %p176, %p177
      %p179 = scmp.ne.s32.totalorder %s165, %s166
      %p180 = scmp.eq.s32.totalorder %s27, 1
      %p181 = por %p179, %p180
      %p183 = scmp.ne.s32.totalorder %s166, %s182
      %p184 = scmp.eq.s32.totalorder %s27, 0
      %p185 = por %p183, %p184
      %p186 = scmp.le.s32.totalorder 1, %s21
      %p187 = scmp.lt.s32.totalorder %s21, 3
      %p188 = pnand %p186, %p187
      %p189 = pneg %p188
      // Predicated region
      $region9: #{tpu_custom_call.1} parent=5 // pred_check
        _
      $region10: #{tpu_custom_call.1} parent=5 // pred_check_branch
        %191 = sbr.rel (%p188) target = $region12
      $region11: #{tpu_custom_call.1} parent=5 // pred_region
        %s192 = ssub.s32 %s21, 1
        // Predicated region
        $region13: #{tpu_custom_call.1} parent=11 // pred_check
          %p193 = pneg %p42
        $region14: #{tpu_custom_call.1} parent=11 // pred_check_branch
          %195 = sbr.rel (%p193) target = $region16
        $region15: #{tpu_custom_call.1} parent=11 // pred_region
          _
        $region16: #{tpu_custom_call.1} parent=11 // pred_fallthru
          _
        // Predicated region
        $region17: #{tpu_custom_call.1} parent=11 // pred_check
          %p196 = pneg %p63
        $region18: #{tpu_custom_call.1} parent=11 // pred_check_branch
          %198 = sbr.rel (%p196) target = $region20
        $region19: #{tpu_custom_call.1} parent=11 // pred_region
          _
        $region20: #{tpu_custom_call.1} parent=11 // pred_fallthru
          _
        // Predicated region
        $region21: #{tpu_custom_call.1} parent=11 // pred_check
          %p199 = pneg %p84
        $region22: #{tpu_custom_call.1} parent=11 // pred_check_branch
          %201 = sbr.rel (%p199) target = $region24
        $region23: #{tpu_custom_call.1} parent=11 // pred_region
          _
        $region24: #{tpu_custom_call.1} parent=11 // pred_fallthru
          _
        // Predicated region
        $region25: #{tpu_custom_call.1} parent=11 // pred_check
          %p202 = pneg %p131
        $region26: #{tpu_custom_call.1} parent=11 // pred_check_branch
          %204 = sbr.rel (%p202) target = $region28
        $region27: #{tpu_custom_call.1} parent=11 // pred_region
          %s206 = ssub.s32 2048, 2048
          %207 = vsyncadd [#allocation8], %s206
          %s208 = sshll.u32 [#allocation7], 4
          %s209 = int_to_ptr.vmem [resolvable:$true] %s208
          %214 = dma.hbm_to_vmem [thread:$0]  %s4, 2048, %s209, [#allocation8], 64, 64, 4
        $region28: #{tpu_custom_call.1} parent=11 // pred_fallthru
          _
        // Predicated region
        $region29: #{tpu_custom_call.1} parent=11 // pred_check
          %p215 = pneg %p152
        $region30: #{tpu_custom_call.1} parent=11 // pred_check_branch
          %217 = sbr.rel (%p215) target = $region32
        $region31: #{tpu_custom_call.1} parent=11 // pred_region
          _
        $region32: #{tpu_custom_call.1} parent=11 // pred_fallthru
          _
      $region12: #{tpu_custom_call.1} parent=5 // pred_fallthru
        _
      %p218 = scmp.lt.s32.totalorder %s21, 2
      // Predicated region
      $region33: #{tpu_custom_call.1} parent=5 // pred_check
        %p219 = pneg %p218
      $region34: #{tpu_custom_call.1} parent=5 // pred_check_branch
        %221 = sbr.rel (%p219) target = $region36
      $region35: #{tpu_custom_call.1} parent=5 // pred_region
        // Predicated region
        $region37: #{tpu_custom_call.1} parent=35 // pred_check
          %p222 = pneg %p104
        $region38: #{tpu_custom_call.1} parent=35 // pred_check_branch
          %224 = sbr.rel (%p222) target = $region40
        $region39: #{tpu_custom_call.1} parent=35 // pred_region
          %s225 = sand.u32 %s94, 1
          %s226 = scalar_lea.sflag [#allocation5], %s225
          %s227 = sand.u32 %s94, 1
          %s228 = smul.addr %s227, 8
          %s229 = scalar_lea.vmem [#allocation4], %s228
          %s231 = ssub.s32 128, 128
          %232 = vsyncadd %s226, %s231
          %s233 = smul.addr %s21, 128
          %s234 = scalar_lea.hbm %s3, %s233
          %s236 = sshll.u32 %s229, 4
          %s237 = int_to_ptr.vmem [resolvable:$true] %s236
          %239 = dma.hbm_to_vmem [thread:$0]  %s234, 128, %s237, %s226
        $region40: #{tpu_custom_call.1} parent=35 // pred_fallthru
          _
      $region36: #{tpu_custom_call.1} parent=5 // pred_fallthru
        _
      %p240 = scmp.le.s32.totalorder 1, %s21
      %p241 = scmp.lt.s32.totalorder %s21, 3
      %p242 = pnand %p240, %p241
      %p243 = pneg %p242
      // Predicated region
      $region41: #{tpu_custom_call.1} parent=5 // pred_check
        _
      $region42: #{tpu_custom_call.1} parent=5 // pred_check_branch
        %245 = sbr.rel (%p242) target = $region44
      $region43: #{tpu_custom_call.1} parent=5 // pred_region
        %s246 = ssub.s32 %s21, 1
        %s247 = sand.u32 %s97, 1
        %s248 = scalar_lea.sflag [#allocation5], %s247
        %s249 = sand.u32 %s97, 1
        %s250 = smul.addr %s249, 8
        %s251 = scalar_lea.vmem [#allocation4], %s250
        // Predicated region
        $region45: #{tpu_custom_call.1} parent=43 // pred_check
          %p252 = pneg %p110
        $region46: #{tpu_custom_call.1} parent=43 // pred_check_branch
          %254 = sbr.rel (%p252) target = $region48
        $region47: #{tpu_custom_call.1} parent=43 // pred_region
          %255 = dma.done %s248, 128
        $region48: #{tpu_custom_call.1} parent=43 // pred_fallthru
          _
        // Predicated region
        $region49: #{tpu_custom_call.1} parent=43 // pred_check
          %p256 = pneg %p131
        $region50: #{tpu_custom_call.1} parent=43 // pred_check_branch
          %258 = sbr.rel (%p256) target = $region52
        $region51: #{tpu_custom_call.1} parent=43 // pred_region
          %259 = dma.done [#allocation8], 2048
        $region52: #{tpu_custom_call.1} parent=43 // pred_fallthru
          _
        %p260 = pneg %p42
        %p261 = pneg %p39
        %p262 = pneg %p63
        %p263 = pneg %p60
        %p264 = pneg %p84
        %p265 = pneg %p81
        %s266 = sand.u32 %s97, 1
        %s267 = scalar_lea.sflag [#allocation5], %s266
        %s268 = sand.u32 %s97, 1
        %s269 = smul.addr %s268, 8
        %s270 = scalar_lea.vmem [#allocation4], %s269
        %p271 = pneg %p110
        %p272 = pneg %p107
        %p273 = pneg %p131
        %p274 = pneg %p128
        %p275 = pneg %p152
        %p276 = pneg %p149
        %p277 = pneg %p178
        %p278 = pneg %p175
        %s279 = sand.u32 %s165, 1
        %s280 = scalar_lea.sflag [#allocation6], %s279
        %s281 = sand.u32 %s165, 1
        %s282 = smul.addr %s281, 8
        %s283 = scalar_lea.vmem [#allocation9], %s282
        %v285 = vld [vmem:[%s251] sm:$0xff]
        %v286 = vpack.c.bf16 %v285, %v285
        %v287 = vld [vmem:[#allocation7] sm:$0xf]
        %v288 = vld [vmem:[#allocation7 + $0x4] sm:$0xf]
        %v289 = vld [vmem:[#allocation7 + $0x8] sm:$0xf]
        %v290 = vld [vmem:[#allocation7 + $0xc] sm:$0xf]
        %v291 = vld [vmem:[#allocation7 + $0x10] sm:$0xf]
        %v292 = vld [vmem:[#allocation7 + $0x14] sm:$0xf]
        %v293 = vld [vmem:[#allocation7 + $0x18] sm:$0xf]
        %v294 = vld [vmem:[#allocation7 + $0x1c] sm:$0xf]
        %v295 = vld [vmem:[#allocation7 + $0x20] sm:$0xf]
        %v296 = vld [vmem:[#allocation7 + $0x24] sm:$0xf]
        %v297 = vld [vmem:[#allocation7 + $0x28] sm:$0xf]
        %v298 = vld [vmem:[#allocation7 + $0x2c] sm:$0xf]
        %v299 = vld [vmem:[#allocation7 + $0x30] sm:$0xf]
        %v300 = vld [vmem:[#allocation7 + $0x34] sm:$0xf]
        %v301 = vld [vmem:[#allocation7 + $0x38] sm:$0xf]
        %v302 = vld [vmem:[#allocation7 + $0x3c] sm:$0xf]
        %v319 = vunpack.c.l.b16 %v287
        %v320 = vunpack.c.l.b16 %v288
        %v321 = vunpack.c.l.b16 %v289
        %v322 = vunpack.c.l.b16 %v290
        %v323 = vunpack.c.l.b16 %v291
        %v324 = vunpack.c.l.b16 %v292
        %v325 = vunpack.c.l.b16 %v293
        %v326 = vunpack.c.l.b16 %v294
        %v327 = vunpack.c.l.b16 %v295
        %v328 = vunpack.c.l.b16 %v296
        %v329 = vunpack.c.l.b16 %v297
        %v330 = vunpack.c.l.b16 %v298
        %v331 = vunpack.c.l.b16 %v299
        %v332 = vunpack.c.l.b16 %v300
        %v333 = vunpack.c.l.b16 %v301
        %v334 = vunpack.c.l.b16 %v302
        %v335 = vpack.c.b16 %v320, %v319
        %v336 = vpack.c.b16 %v322, %v321
        %v337 = vpack.c.b16 %v324, %v323
        %v338 = vpack.c.b16 %v326, %v325
        %v339 = vpack.c.b16 %v328, %v327
        %v340 = vpack.c.b16 %v330, %v329
        %v341 = vpack.c.b16 %v332, %v331
        %v342 = vpack.c.b16 %v334, %v333
        %351 = vmatprep.subr.bf16.mxu0 0
        %352 = vmatpush1.bf16.msra.mxu0 %v342
        %353 = vmatprep.subr.bf16.mxu0 0
        %354 = vmatpush1.bf16.msra.mxu0 %v341
        %355 = vmatprep.subr.bf16.mxu0 0
        %356 = vmatpush1.bf16.msra.mxu0 %v340
        %357 = vmatprep.subr.bf16.mxu0 0
        %358 = vmatpush1.bf16.msra.mxu0 %v339
        %359 = vmatprep.subr.bf16.mxu0 0
        %360 = vmatpush1.bf16.msra.mxu0 %v338
        %361 = vmatprep.subr.bf16.mxu0 0
        %362 = vmatpush1.bf16.msra.mxu0 %v337
        %363 = vmatprep.subr.bf16.mxu0 0
        %364 = vmatpush1.bf16.msra.mxu0 %v336
        %365 = vmatprep.subr.bf16.mxu0 0
        %366 = vmatpush1.bf16.msra.mxu0 %v335
        %367 = vmatprep.subr.bf16.mxu0 0
        %368 = vmatpush2.bf16.msra.mxu0 0
        %369 = vmatprep.subr.bf16.mxu0 0
        %370 = vmatpush2.bf16.msra.mxu0 0
        %371 = vmatprep.subr.bf16.mxu0 0
        %372 = vmatpush2.bf16.msra.mxu0 0
        %373 = vmatprep.subr.bf16.mxu0 0
        %374 = vmatpush2.bf16.msra.mxu0 0
        %375 = vmatprep.subr.bf16.mxu0 0
        %376 = vmatpush2.bf16.msra.mxu0 0
        %377 = vmatprep.subr.bf16.mxu0 0
        %378 = vmatpush2.bf16.msra.mxu0 0
        %379 = vmatprep.subr.bf16.mxu0 0
        %380 = vmatpush2.bf16.msra.mxu0 0
        %381 = vmatprep.subr.bf16.mxu0 0
        %382 = vmatpush2.bf16.msra.mxu0 0
        %383 = vmatprep.mubr.bf16.mxu0 0
        %384 = vmatmul.mubr.bf16.gmra.mxu0 %v286
        %v385 = vpop.f32.mrf.mxu0
        %v386 = vadd.f32 0.0, %v385
        %v387 = vpop.f32.mrf.mxu0
        %v388 = vpop.f32.mrf.mxu0
        %v389 = vpop.f32.mrf.mxu0
        %390 = vdwg.mxu0
        %v391 = vadd.f32 %v285, %v386
        %v392 = vld [vmem:[%s5] sm:$0x1]
        %v394 = vlaneseq
        %v395 = vshrl.u32 %v394, 7
        %v396 = vsub.s32 0, %v395
        %v397 = vrot.slane %v392, %v396
        %v399 = vadd.f32 %v391, %v397
        %v400 = vpack.c.bf16 %v399, %v399
        %s401 = scalar_lea.vmem [#allocation7], 64
        %v402 = vld [vmem:[%s401] sm:$0xf]
        %v403 = vld [vmem:[%s401 + $0x4] sm:$0xf]
        %v404 = vld [vmem:[%s401 + $0x8] sm:$0xf]
        %v405 = vld [vmem:[%s401 + $0xc] sm:$0xf]
        %v406 = vld [vmem:[%s401 + $0x10] sm:$0xf]
        %v407 = vld [vmem:[%s401 + $0x14] sm:$0xf]
        %v408 = vld [vmem:[%s401 + $0x18] sm:$0xf]
        %v409 = vld [vmem:[%s401 + $0x1c] sm:$0xf]
        %v410 = vld [vmem:[%s401 + $0x20] sm:$0xf]
        %v411 = vld [vmem:[%s401 + $0x24] sm:$0xf]
        %v412 = vld [vmem:[%s401 + $0x28] sm:$0xf]
        %v413 = vld [vmem:[%s401 + $0x2c] sm:$0xf]
        %v414 = vld [vmem:[%s401 + $0x30] sm:$0xf]
        %v415 = vld [vmem:[%s401 + $0x34] sm:$0xf]
        %v416 = vld [vmem:[%s401 + $0x38] sm:$0xf]
        %v417 = vld [vmem:[%s401 + $0x3c] sm:$0xf]
        %v434 = vunpack.c.l.b16 %v402
        %v435 = vunpack.c.l.b16 %v403
        %v436 = vunpack.c.l.b16 %v404
        %v437 = vunpack.c.l.b16 %v405
        %v438 = vunpack.c.l.b16 %v406
        %v439 = vunpack.c.l.b16 %v407
        %v440 = vunpack.c.l.b16 %v408
        %v441 = vunpack.c.l.b16 %v409
        %v442 = vunpack.c.l.b16 %v410
        %v443 = vunpack.c.l.b16 %v411
        %v444 = vunpack.c.l.b16 %v412
        %v445 = vunpack.c.l.b16 %v413
        %v446 = vunpack.c.l.b16 %v414
        %v447 = vunpack.c.l.b16 %v415
        %v448 = vunpack.c.l.b16 %v416
        %v449 = vunpack.c.l.b16 %v417
        %v450 = vpack.c.b16 %v435, %v434
        %v451 = vpack.c.b16 %v437, %v436
        %v452 = vpack.c.b16 %v439, %v438
        %v453 = vpack.c.b16 %v441, %v440
        %v454 = vpack.c.b16 %v443, %v442
        %v455 = vpack.c.b16 %v445, %v444
        %v456 = vpack.c.b16 %v447, %v446
        %v457 = vpack.c.b16 %v449, %v448
        %466 = vmatprep.subr.bf16.mxu0 0
        %467 = vmatpush1.bf16.msra.mxu0 %v457
        %468 = vmatprep.subr.bf16.mxu0 0
        %469 = vmatpush1.bf16.msra.mxu0 %v456
        %470 = vmatprep.subr.bf16.mxu0 0
        %471 = vmatpush1.bf16.msra.mxu0 %v455
        %472 = vmatprep.subr.bf16.mxu0 0
        %473 = vmatpush1.bf16.msra.mxu0 %v454
        %474 = vmatprep.subr.bf16.mxu0 0
        %475 = vmatpush1.bf16.msra.mxu0 %v453
        %476 = vmatprep.subr.bf16.mxu0 0
        %477 = vmatpush1.bf16.msra.mxu0 %v452
        %478 = vmatprep.subr.bf16.mxu0 0
        %479 = vmatpush1.bf16.msra.mxu0 %v451
        %480 = vmatprep.subr.bf16.mxu0 0
        %481 = vmatpush1.bf16.msra.mxu0 %v450
        %482 = vmatprep.subr.bf16.mxu0 0
        %483 = vmatpush2.bf16.msra.mxu0 0
        %484 = vmatprep.subr.bf16.mxu0 0
        %485 = vmatpush2.bf16.msra.mxu0 0
        %486 = vmatprep.subr.bf16.mxu0 0
        %487 = vmatpush2.bf16.msra.mxu0 0
        %488 = vmatprep.subr.bf16.mxu0 0
        %489 = vmatpush2.bf16.msra.mxu0 0
        %490 = vmatprep.subr.bf16.mxu0 0
        %491 = vmatpush2.bf16.msra.mxu0 0
        %492 = vmatprep.subr.bf16.mxu0 0
        %493 = vmatpush2.bf16.msra.mxu0 0
        %494 = vmatprep.subr.bf16.mxu0 0
        %495 = vmatpush2.bf16.msra.mxu0 0
        %496 = vmatprep.subr.bf16.mxu0 0
        %497 = vmatpush2.bf16.msra.mxu0 0
        %498 = vmatprep.mubr.bf16.mxu0 0
        %499 = vmatmul.mubr.bf16.gmra.mxu0 %v400
        %v500 = vpop.f32.mrf.mxu0
        %v501 = vadd.f32 0.0, %v500
        %v502 = vpop.f32.mrf.mxu0
        %v503 = vpop.f32.mrf.mxu0
        %v504 = vpop.f32.mrf.mxu0
        %505 = vdwg.mxu0
        %v506 = vadd.f32 %v399, %v501
        %s507 = scalar_lea.vmem %s5, 1
        %v508 = vld [vmem:[%s507] sm:$0x1]
        %v510 = vlaneseq
        %v511 = vshrl.u32 %v510, 7
        %v512 = vsub.s32 0, %v511
        %v513 = vrot.slane %v508, %v512
        %v515 = vadd.f32 %v506, %v513
        %516 = vadd.xlane.f32.xlu0 %v515
        %v517 = vpop.xlane.xlu0 %516
        %v518 = vmul.f32 %v517, 0.03125
        %v519 = vsub.f32 %v515, %v518
        %v520 = vld [vmem:[%s2] sm:$0x1]
        %v522 = vlaneseq
        %v523 = vshrl.u32 %v522, 7
        %v524 = vsub.s32 0, %v523
        %v525 = vrot.slane %v520, %v524
        %v527 = vmul.f32 %v519, %v525
        %v528 = vmul.f32 %v527, %v527
        %529 = vadd.xlane.f32.xlu0 %v528
        %v530 = vpop.xlane.xlu0 %529
        %v531 = vmul.f32 %v530, 0.032258064
        %v532 = vrsqrt.pop %v531
        %v533 = vmul.f32 %v531, %v532
        %vm534 = vcmp.eq.f32.partialorder %v531, inf
        %v535 = vsel %vm534, %v531, %v533
        %vm536 = vcmp.eq.f32.partialorder %v531, 0.0
        %v537 = vand.u32 %v531, 2147483648
        %v538 = vsel %vm536, %v537, %v535
        %v539 = vadd.f32 %v538, 1e-06
        %v540 = vrsqrt.pop %v539
        %s541 = sld [smem:[#allocation3]]
        %v542 = vstv %s541
        %v543 = vmul.f32 %v540, %v542
        %v544 = vmul.f32 %v519, %v543
        %s545 = sld [smem:[#allocation2]]
        %v546 = vstv %s545
        %v547 = vadd.f32 %v544, %v546
        %548 = vst [vmem:[%s283] sm:$0xff] %v547
        %s549 = sand.u32 %s165, 1
        %s550 = scalar_lea.sflag [#allocation6], %s549
        %s551 = sand.u32 %s165, 1
        %s552 = smul.addr %s551, 8
        %s553 = scalar_lea.vmem [#allocation9], %s552
        // Predicated region
        $region53: #{tpu_custom_call.1} parent=43 // pred_check
          %p554 = pneg %p175
        $region54: #{tpu_custom_call.1} parent=43 // pred_check_branch
          %556 = sbr.rel (%p554) target = $region56
        $region55: #{tpu_custom_call.1} parent=43 // pred_region
          %s558 = ssub.s32 128, 128
          %559 = vsyncadd %s550, %s558
          %s560 = smul.addr %s26, 128
          %s561 = scalar_lea.hbm %s6, %s560
          %s563 = sshll.u32 %s553, 4
          %s564 = int_to_ptr.vmem [resolvable:$true] %s563
          %566 = dma.vmem_to_hbm [thread:$0]  %s564, 128, %s561, %s550
        $region56: #{tpu_custom_call.1} parent=43 // pred_fallthru
          _
      $region44: #{tpu_custom_call.1} parent=5 // pred_fallthru
        _
      %p567 = scmp.le.s32.totalorder 2, %s21
      // Predicated region
      $region57: #{tpu_custom_call.1} parent=5 // pred_check
        %p568 = pneg %p567
      $region58: #{tpu_custom_call.1} parent=5 // pred_check_branch
        %570 = sbr.rel (%p568) target = $region60
      $region59: #{tpu_custom_call.1} parent=5 // pred_region
        %s571 = ssub.s32 %s21, 2
        // Predicated region
        $region61: #{tpu_custom_call.1} parent=59 // pred_check
          %p572 = pneg %p181
        $region62: #{tpu_custom_call.1} parent=59 // pred_check_branch
          %574 = sbr.rel (%p572) target = $region64
        $region63: #{tpu_custom_call.1} parent=59 // pred_region
          %s575 = sand.u32 %s166, 1
          %s576 = scalar_lea.sflag [#allocation6], %s575
          %s577 = sand.u32 %s166, 1
          %s578 = smul.addr %s577, 8
          %s579 = scalar_lea.vmem [#allocation9], %s578
          %580 = dma.done %s576, 128
        $region64: #{tpu_custom_call.1} parent=59 // pred_fallthru
          _
      $region60: #{tpu_custom_call.1} parent=5 // pred_fallthru
        _
    $region6: #{tpu_custom_call.1} parent=1 // loop_footer
      %s25 = sadd.s32 1, %s21
    $region7: #{tpu_custom_call.1} parent=1 // loop_footer_branch
      %20 = sbr.rel target = $region3
    $region8: #{tpu_custom_call.1} parent=1 // loop_exit
      _
    %581 = vsyncpa [#allocation5], 1
    %s582 = scalar_lea.sflag [#allocation5], 1
    %583 = vsyncpa %s582, 1
    %584 = vsyncpa [#allocation8], 1
    %585 = vsyncpa [#allocation6], 1
    %s586 = scalar_lea.sflag [#allocation6], 1
    %587 = vsyncpa %s586, 1

// kernel: tpu_custom_call.1
$region0: #{tpu_custom_call.1}
  #allocation0 [shape = 'u32[]', space=smem, size = 0x4, offset = 0x4, fixed_abs, tag = 'smem constant byte address 0x4 - core index']
  #allocation1 [shape = 'u32[144,128]{1,0:T(1,128)}', space=vmem, size = 0x12000, scoped, tag = 'internal scratch']
  #allocation2 [shape = 'f32[1]{0:T(128)S(6)}', space=smem, size = 0x200, scoped, tag = 'scoped memory for tpu_custom_call.1']
  #allocation3 [shape = 'f32[1]{0:T(128)S(6)}', space=smem, size = 0x200, scoped, tag = 'scoped memory for tpu_custom_call.1']
  %s0 = inlined_call_operand.<no memory space> [shape: f32[1], index: 0, kind: input, shape index: {}]
  %s1 = inlined_call_operand.<no memory space> [shape: f32[1], index: 1, kind: input, shape index: {}]
  %s2 = inlined_call_operand.vmem [shape: f32[1,128], index: 2, kind: input, shape index: {}]
  %s3 = inlined_call_operand.hbm [shape: f32[16,128], index: 3, kind: input, shape index: {}]
  %s4 = inlined_call_operand.hbm [shape: bf16[2,128,128], index: 4, kind: input, shape index: {}]
  %s5 = inlined_call_operand.vmem [shape: f32[2,1,128], index: 5, kind: input, shape index: {}]
  %s6 = inlined_call_operand.hbm [shape: f32[16,128], index: 6, kind: output, shape index: {}]
  %s7 = sld [smem:[#allocation0]]
  $region65: #{tpu_custom_call.1} parent=0
    _
  %s9 = ssub.s32 1, %s7
  %s10 = scalar_select 0, %s9, %s7
  %11 = sst [smem:[#allocation2]] %s0
  %12 = sst [smem:[#allocation3]] %s1
  $region1: #{tpu_custom_call.1} parent=0
    #allocation4 [shape = 'u8[8192]{0}', space=vmem, size = 0x2000, scoped, tag = 'input window, operand 3']
    #allocation5 [shape = 's32[2]{0}', space=sflag, size = 0x8, scoped, tag = 'scoped memory for tpu_custom_call.1']
    #allocation6 [shape = 's32[2]{0}', space=sflag, size = 0x8, scoped, tag = 'scoped memory for tpu_custom_call.1']
    #allocation7 [shape = 'u8[65536]{0}', space=vmem, size = 0x10000, scoped, tag = 'input window, operand 4, single buffered']
    #allocation8 [shape = 's32[1]{0}', space=sflag, size = 0x4, scoped, tag = 'scoped memory for tpu_custom_call.1']
    #allocation9 [shape = 'u8[8192]{0}', space=vmem, size = 0x2000, scoped, tag = 'output window, operand 0']
    %13 = vsyncpa [#allocation5], 0
    %s14 = scalar_lea.sflag [#allocation5], 1
    %15 = vsyncpa %s14, 0
    %16 = vsyncpa [#allocation8], 0
    %17 = vsyncpa [#allocation6], 0
    %s18 = scalar_lea.sflag [#allocation6], 1
    %19 = vsyncpa %s18, 0
    loop: start=0, step=1, limit=4
    $region2: #{tpu_custom_call.1} parent=1 // loop_pre_header
      _
    $region3: #{tpu_custom_call.1} parent=1 // loop_header
      %s21 = sphi 0, %s25
      %p22 = scmp.ge.s32.totalorder %s21, 4
      %s29 = sphi 0, %s29
      %s31 = sphi 0, %s29
      %s32 = sphi 0, %s31
      %s46 = sphi 0, %s32
      %s50 = sphi 0, %s50
      %s52 = sphi 0, %s50
      %s53 = sphi 0, %s52
      %s67 = sphi 0, %s53
      %s71 = sphi 0, %s71
      %s73 = sphi 0, %s71
      %s74 = sphi 0, %s73
      %s88 = sphi 0, %s74
      %s94 = sphi 0, %s96
      %s97 = sphi 0, %s94
      %s98 = sphi 0, %s97
      %s114 = sphi 0, %s98
      %s118 = sphi 0, %s118
      %s120 = sphi 0, %s118
      %s121 = sphi 0, %s120
      %s135 = sphi 0, %s121
      %s139 = sphi 0, %s139
      %s141 = sphi 0, %s139
      %s142 = sphi 0, %s141
      %s156 = sphi 0, %s142
      %s162 = sphi 0, %s164
      %s165 = sphi 0, %s162
      %s166 = sphi 0, %s165
      %s182 = sphi 0, %s166
    $region4: #{tpu_custom_call.1} parent=1 // loop_header_branch
      %24 = sbr.rel (%p22) target = $region8
    $region5: #{tpu_custom_call.1} parent=1 // loop_body
      %s26 = ssub.s32 %s21, 1
      %s27 = ssub.s32 %s21, 2
      %s28 = sadd.s32 %s21, 1
      %s30 = sadd.s32 %s29, 1
      %p33 = scmp.eq.s32.totalorder %s21, 1
      %p34 = scmp.ne.s32.totalorder %s29, %s31
      %p35 = scmp.eq.s32.totalorder %s21, 0
      %p36 = por %p34, %p35
      %p37 = scmp.ne.s32.totalorder %s29, %s31
      %p38 = scmp.eq.s32.totalorder %s26, 1
      %p39 = por %p37, %p38
      %p40 = scmp.ne.s32.totalorder %s31, %s32
      %p41 = scmp.eq.s32.totalorder %s26, 0
      %p42 = por %p40, %p41
      %p43 = scmp.ne.s32.totalorder %s31, %s32
      %p44 = scmp.eq.s32.totalorder %s27, 1
      %p45 = por %p43, %p44
      %p47 = scmp.ne.s32.totalorder %s32, %s46
      %p48 = scmp.eq.s32.totalorder %s27, 0
      %p49 = por %p47, %p48
      %s51 = sadd.s32 %s50, 1
      %p54 = scmp.eq.s32.totalorder %s21, 1
      %p55 = scmp.ne.s32.totalorder %s50, %s52
      %p56 = scmp.eq.s32.totalorder %s21, 0
      %p57 = por %p55, %p56
      %p58 = scmp.ne.s32.totalorder %s50, %s52
      %p59 = scmp.eq.s32.totalorder %s26, 1
      %p60 = por %p58, %p59
      %p61 = scmp.ne.s32.totalorder %s52, %s53
      %p62 = scmp.eq.s32.totalorder %s26, 0
      %p63 = por %p61, %p62
      %p64 = scmp.ne.s32.totalorder %s52, %s53
      %p65 = scmp.eq.s32.totalorder %s27, 1
      %p66 = por %p64, %p65
      %p68 = scmp.ne.s32.totalorder %s53, %s67
      %p69 = scmp.eq.s32.totalorder %s27, 0
      %p70 = por %p68, %p69
      %s72 = sadd.s32 %s71, 1
      %p75 = scmp.eq.s32.totalorder %s21, 1
      %p76 = scmp.ne.s32.totalorder %s71, %s73
      %p77 = scmp.eq.s32.totalorder %s21, 0
      %p78 = por %p76, %p77
      %p79 = scmp.ne.s32.totalorder %s71, %s73
      %p80 = scmp.eq.s32.totalorder %s26, 1
      %p81 = por %p79, %p80
      %p82 = scmp.ne.s32.totalorder %s73, %s74
      %p83 = scmp.eq.s32.totalorder %s26, 0
      %p84 = por %p82, %p83
      %p85 = scmp.ne.s32.totalorder %s73, %s74
      %p86 = scmp.eq.s32.totalorder %s27, 1
      %p87 = por %p85, %p86
      %p89 = scmp.ne.s32.totalorder %s74, %s88
      %p90 = scmp.eq.s32.totalorder %s27, 0
      %p91 = por %p89, %p90
      %s92 = ssub.s32 %s21, %s28
      %p93 = scmp.eq.s32.totalorder %s92, 0
      %s95 = sadd.s32 %s94, 1
      %s96 = scalar_select %p93, %s94, %s95
      %p99 = pneg %p93
      %p100 = scmp.eq.s32.totalorder %s21, 1
      %p101 = por %p99, %p100
      %p102 = scmp.ne.s32.totalorder %s94, %s97
      %p103 = scmp.eq.s32.totalorder %s21, 0
      %p104 = por %p102, %p103
      %p105 = scmp.ne.s32.totalorder %s94, %s97
      %p106 = scmp.eq.s32.totalorder %s26, 1
      %p107 = por %p105, %p106
      %p108 = scmp.ne.s32.totalorder %s97, %s98
      %p109 = scmp.eq.s32.totalorder %s26, 0
      %p110 = por %p108, %p109
      %p111 = scmp.ne.s32.totalorder %s97, %s98
      %p112 = scmp.eq.s32.totalorder %s27, 1
      %p113 = por %p111, %p112
      %p115 = scmp.ne.s32.totalorder %s98, %s114
      %p116 = scmp.eq.s32.totalorder %s27, 0
      %p117 = por %p115, %p116
      %s119 = sadd.s32 %s118, 1
      %p122 = scmp.eq.s32.totalorder %s21, 1
      %p123 = scmp.ne.s32.totalorder %s118, %s120
      %p124 = scmp.eq.s32.totalorder %s21, 0
      %p125 = por %p123, %p124
      %p126 = scmp.ne.s32.totalorder %s118, %s120
      %p127 = scmp.eq.s32.totalorder %s26, 1
      %p128 = por %p126, %p127
      %p129 = scmp.ne.s32.totalorder %s120, %s121
      %p130 = scmp.eq.s32.totalorder %s26, 0
      %p131 = por %p129, %p130
      %p132 = scmp.ne.s32.totalorder %s120, %s121
      %p133 = scmp.eq.s32.totalorder %s27, 1
      %p134 = por %p132, %p133
      %p136 = scmp.ne.s32.totalorder %s121, %s135
      %p137 = scmp.eq.s32.totalorder %s27, 0
      %p138 = por %p136, %p137
      %s140 = sadd.s32 %s139, 1
      %p143 = scmp.eq.s32.totalorder %s21, 1
      %p144 = scmp.ne.s32.totalorder %s139, %s141
      %p145 = scmp.eq.s32.totalorder %s21, 0
      %p146 = por %p144, %p145
      %p147 = scmp.ne.s32.totalorder %s139, %s141
      %p148 = scmp.eq.s32.totalorder %s26, 1
      %p149 = por %p147, %p148
      %p150 = scmp.ne.s32.totalorder %s141, %s142
      %p151 = scmp.eq.s32.totalorder %s26, 0
      %p152 = por %p150, %p151
      %p153 = scmp.ne.s32.totalorder %s141, %s142
      %p154 = scmp.eq.s32.totalorder %s27, 1
      %p155 = por %p153, %p154
      %p157 = scmp.ne.s32.totalorder %s142, %s156
      %p158 = scmp.eq.s32.totalorder %s27, 0
      %p159 = por %p157, %p158
      %s160 = ssub.s32 %s21, %s28
      %p161 = scmp.eq.s32.totalorder %s160, 0
      %s163 = sadd.s32 %s162, 1
      %s164 = scalar_select %p161, %s162, %s163
      %p167 = pneg %p161
      %p168 = scmp.eq.s32.totalorder %s21, 1
      %p169 = por %p167, %p168
      %p170 = scmp.ne.s32.totalorder %s162, %s165
      %p171 = scmp.eq.s32.totalorder %s21, 0
      %p172 = por %p170, %p171
      %p173 = scmp.ne.s32.totalorder %s162, %s165
      %p174 = scmp.eq.s32.totalorder %s26, 1
      %p175 = por %p173, %p174
      %p176 = scmp.ne.s32.totalorder %s165, %s166
      %p177 = scmp.eq.s32.totalorder %s26, 0
      %p178 = por %p176, %p177
      %p179 = scmp.ne.s32.totalorder %s165, %s166
      %p180 = scmp.eq.s32.totalorder %s27, 1
      %p181 = por %p179, %p180
      %p183 = scmp.ne.s32.totalorder %s166, %s182
      %p184 = scmp.eq.s32.totalorder %s27, 0
      %p185 = por %p183, %p184
      %p186 = scmp.le.s32.totalorder 1, %s21
      %p187 = scmp.lt.s32.totalorder %s21, 3
      %p188 = pnand %p186, %p187
      %p189 = pneg %p188
      // Predicated region
      $region9: #{tpu_custom_call.1} parent=5 // pred_check
        _
      $region10: #{tpu_custom_call.1} parent=5 // pred_check_branch
        %191 = sbr.rel (%p188) target = $region12
      $region11: #{tpu_custom_call.1} parent=5 // pred_region
        %s192 = ssub.s32 %s21, 1
        // Predicated region
        $region13: #{tpu_custom_call.1} parent=11 // pred_check
          %p193 = pneg %p42
        $region14: #{tpu_custom_call.1} parent=11 // pred_check_branch
          %195 = sbr.rel (%p193) target = $region16
        $region15: #{tpu_custom_call.1} parent=11 // pred_region
          _
        $region16: #{tpu_custom_call.1} parent=11 // pred_fallthru
          _
        // Predicated region
        $region17: #{tpu_custom_call.1} parent=11 // pred_check
          %p196 = pneg %p63
        $region18: #{tpu_custom_call.1} parent=11 // pred_check_branch
          %198 = sbr.rel (%p196) target = $region20
        $region19: #{tpu_custom_call.1} parent=11 // pred_region
          _
        $region20: #{tpu_custom_call.1} parent=11 // pred_fallthru
          _
        // Predicated region
        $region21: #{tpu_custom_call.1} parent=11 // pred_check
          %p199 = pneg %p84
        $region22: #{tpu_custom_call.1} parent=11 // pred_check_branch
          %201 = sbr.rel (%p199) target = $region24
        $region23: #{tpu_custom_call.1} parent=11 // pred_region
          _
        $region24: #{tpu_custom_call.1} parent=11 // pred_fallthru
          _
        // Predicated region
        $region25: #{tpu_custom_call.1} parent=11 // pred_check
          %p202 = pneg %p131
        $region26: #{tpu_custom_call.1} parent=11 // pred_check_branch
          %204 = sbr.rel (%p202) target = $region28
        $region27: #{tpu_custom_call.1} parent=11 // pred_region
          %s206 = ssub.s32 2048, 2048
          %207 = vsyncadd [#allocation8], %s206
          %s208 = sshll.u32 [#allocation7], 4
          %s209 = int_to_ptr.vmem [resolvable:$true] %s208
          %214 = dma.hbm_to_vmem [thread:$0]  %s4, 2048, %s209, [#allocation8], 64, 64, 4
        $region28: #{tpu_custom_call.1} parent=11 // pred_fallthru
          _
        // Predicated region
        $region29: #{tpu_custom_call.1} parent=11 // pred_check
          %p215 = pneg %p152
        $region30: #{tpu_custom_call.1} parent=11 // pred_check_branch
          %217 = sbr.rel (%p215) target = $region32
        $region31: #{tpu_custom_call.1} parent=11 // pred_region
          _
        $region32: #{tpu_custom_call.1} parent=11 // pred_fallthru
          _
      $region12: #{tpu_custom_call.1} parent=5 // pred_fallthru
        _
      %p218 = scmp.lt.s32.totalorder %s21, 2
      // Predicated region
      $region33: #{tpu_custom_call.1} parent=5 // pred_check
        %p219 = pneg %p218
      $region34: #{tpu_custom_call.1} parent=5 // pred_check_branch
        %221 = sbr.rel (%p219) target = $region36
      $region35: #{tpu_custom_call.1} parent=5 // pred_region
        // Predicated region
        $region37: #{tpu_custom_call.1} parent=35 // pred_check
          %p222 = pneg %p104
        $region38: #{tpu_custom_call.1} parent=35 // pred_check_branch
          %224 = sbr.rel (%p222) target = $region40
        $region39: #{tpu_custom_call.1} parent=35 // pred_region
          %s225 = sand.u32 %s94, 1
          %s226 = scalar_lea.sflag [#allocation5], %s225
          %s227 = sand.u32 %s94, 1
          %s228 = smul.addr %s227, 8
          %s229 = scalar_lea.vmem [#allocation4], %s228
          %s231 = ssub.s32 128, 128
          %232 = vsyncadd %s226, %s231
          %s233 = smul.addr %s21, 128
          %s234 = scalar_lea.hbm %s3, %s233
          %s236 = sshll.u32 %s229, 4
          %s237 = int_to_ptr.vmem [resolvable:$true] %s236
          %239 = dma.hbm_to_vmem [thread:$0]  %s234, 128, %s237, %s226
        $region40: #{tpu_custom_call.1} parent=35 // pred_fallthru
          _
      $region36: #{tpu_custom_call.1} parent=5 // pred_fallthru
        _
      %p240 = scmp.le.s32.totalorder 1, %s21
      %p241 = scmp.lt.s32.totalorder %s21, 3
      %p242 = pnand %p240, %p241
      %p243 = pneg %p242
      // Predicated region
      $region41: #{tpu_custom_call.1} parent=5 // pred_check
        _
      $region42: #{tpu_custom_call.1} parent=5 // pred_check_branch
        %245 = sbr.rel (%p242) target = $region44
      $region43: #{tpu_custom_call.1} parent=5 // pred_region
        %s246 = ssub.s32 %s21, 1
        %s247 = sand.u32 %s97, 1
        %s248 = scalar_lea.sflag [#allocation5], %s247
        %s249 = sand.u32 %s97, 1
        %s250 = smul.addr %s249, 8
        %s251 = scalar_lea.vmem [#allocation4], %s250
        // Predicated region
        $region45: #{tpu_custom_call.1} parent=43 // pred_check
          %p252 = pneg %p110
        $region46: #{tpu_custom_call.1} parent=43 // pred_check_branch
          %254 = sbr.rel (%p252) target = $region48
        $region47: #{tpu_custom_call.1} parent=43 // pred_region
          %255 = dma.done %s248, 128
        $region48: #{tpu_custom_call.1} parent=43 // pred_fallthru
          _
        // Predicated region
        $region49: #{tpu_custom_call.1} parent=43 // pred_check
          %p256 = pneg %p131
        $region50: #{tpu_custom_call.1} parent=43 // pred_check_branch
          %258 = sbr.rel (%p256) target = $region52
        $region51: #{tpu_custom_call.1} parent=43 // pred_region
          %259 = dma.done [#allocation8], 2048
        $region52: #{tpu_custom_call.1} parent=43 // pred_fallthru
          _
        %p260 = pneg %p42
        %p261 = pneg %p39
        %p262 = pneg %p63
        %p263 = pneg %p60
        %p264 = pneg %p84
        %p265 = pneg %p81
        %s266 = sand.u32 %s97, 1
        %s267 = scalar_lea.sflag [#allocation5], %s266
        %s268 = sand.u32 %s97, 1
        %s269 = smul.addr %s268, 8
        %s270 = scalar_lea.vmem [#allocation4], %s269
        %p271 = pneg %p110
        %p272 = pneg %p107
        %p273 = pneg %p131
        %p274 = pneg %p128
        %p275 = pneg %p152
        %p276 = pneg %p149
        %p277 = pneg %p178
        %p278 = pneg %p175
        %s279 = sand.u32 %s165, 1
        %s280 = scalar_lea.sflag [#allocation6], %s279
        %s281 = sand.u32 %s165, 1
        %s282 = smul.addr %s281, 8
        %s283 = scalar_lea.vmem [#allocation9], %s282
        %v285 = vld [vmem:[%s251] sm:$0xff]
        %v286 = vpack.c.bf16 %v285, %v285
        %v287 = vld [vmem:[#allocation7] sm:$0xf]
        %v288 = vld [vmem:[#allocation7 + $0x4] sm:$0xf]
        %v289 = vld [vmem:[#allocation7 + $0x8] sm:$0xf]
        %v290 = vld [vmem:[#allocation7 + $0xc] sm:$0xf]
        %v291 = vld [vmem:[#allocation7 + $0x10] sm:$0xf]
        %v292 = vld [vmem:[#allocation7 + $0x14] sm:$0xf]
        %v293 = vld [vmem:[#allocation7 + $0x18] sm:$0xf]
        %v294 = vld [vmem:[#allocation7 + $0x1c] sm:$0xf]
        %v295 = vld [vmem:[#allocation7 + $0x20] sm:$0xf]
        %v296 = vld [vmem:[#allocation7 + $0x24] sm:$0xf]
        %v297 = vld [vmem:[#allocation7 + $0x28] sm:$0xf]
        %v298 = vld [vmem:[#allocation7 + $0x2c] sm:$0xf]
        %v299 = vld [vmem:[#allocation7 + $0x30] sm:$0xf]
        %v300 = vld [vmem:[#allocation7 + $0x34] sm:$0xf]
        %v301 = vld [vmem:[#allocation7 + $0x38] sm:$0xf]
        %v302 = vld [vmem:[#allocation7 + $0x3c] sm:$0xf]
        %v319 = vunpack.c.l.b16 %v287
        %v320 = vunpack.c.l.b16 %v288
        %v321 = vunpack.c.l.b16 %v289
        %v322 = vunpack.c.l.b16 %v290
        %v323 = vunpack.c.l.b16 %v291
        %v324 = vunpack.c.l.b16 %v292
        %v325 = vunpack.c.l.b16 %v293
        %v326 = vunpack.c.l.b16 %v294
        %v327 = vunpack.c.l.b16 %v295
        %v328 = vunpack.c.l.b16 %v296
        %v329 = vunpack.c.l.b16 %v297
        %v330 = vunpack.c.l.b16 %v298
        %v331 = vunpack.c.l.b16 %v299
        %v332 = vunpack.c.l.b16 %v300
        %v333 = vunpack.c.l.b16 %v301
        %v334 = vunpack.c.l.b16 %v302
        %v335 = vpack.c.b16 %v320, %v319
        %v336 = vpack.c.b16 %v322, %v321
        %v337 = vpack.c.b16 %v324, %v323
        %v338 = vpack.c.b16 %v326, %v325
        %v339 = vpack.c.b16 %v328, %v327
        %v340 = vpack.c.b16 %v330, %v329
        %v341 = vpack.c.b16 %v332, %v331
        %v342 = vpack.c.b16 %v334, %v333
        %351 = vmatprep.subr.bf16.mxu0 0
        %352 = vmatpush1.bf16.msra.mxu0 %v342
        %353 = vmatprep.subr.bf16.mxu0 0
        %354 = vmatpush1.bf16.msra.mxu0 %v341
        %355 = vmatprep.subr.bf16.mxu0 0
        %356 = vmatpush1.bf16.msra.mxu0 %v340
        %357 = vmatprep.subr.bf16.mxu0 0
        %358 = vmatpush1.bf16.msra.mxu0 %v339
        %359 = vmatprep.subr.bf16.mxu0 0
        %360 = vmatpush1.bf16.msra.mxu0 %v338
        %361 = vmatprep.subr.bf16.mxu0 0
        %362 = vmatpush1.bf16.msra.mxu0 %v337
        %363 = vmatprep.subr.bf16.mxu0 0
        %364 = vmatpush1.bf16.msra.mxu0 %v336
        %365 = vmatprep.subr.bf16.mxu0 0
        %366 = vmatpush1.bf16.msra.mxu0 %v335
        %367 = vmatprep.subr.bf16.mxu0 0
        %368 = vmatpush2.bf16.msra.mxu0 0
        %369 = vmatprep.subr.bf16.mxu0 0
        %370 = vmatpush2.bf16.msra.mxu0 0
        %371 = vmatprep.subr.bf16.mxu0 0
        %372 = vmatpush2.bf16.msra.mxu0 0
        %373 = vmatprep.subr.bf16.mxu0 0
        %374 = vmatpush2.bf16.msra.mxu0 0
        %375 = vmatprep.subr.bf16.mxu0 0
        %376 = vmatpush2.bf16.msra.mxu0 0
        %377 = vmatprep.subr.bf16.mxu0 0
        %378 = vmatpush2.bf16.msra.mxu0 0
        %379 = vmatprep.subr.bf16.mxu0 0
        %380 = vmatpush2.bf16.msra.mxu0 0
        %381 = vmatprep.subr.bf16.mxu0 0
        %382 = vmatpush2.bf16.msra.mxu0 0
        %383 = vmatprep.mubr.bf16.mxu0 0
        %384 = vmatmul.mubr.bf16.gmra.mxu0 %v286
        %v385 = vpop.f32.mrf.mxu0
        %v386 = vadd.f32 0.0, %v385
        %v387 = vpop.f32.mrf.mxu0
        %v388 = vpop.f32.mrf.mxu0
        %v389 = vpop.f32.mrf.mxu0
        %390 = vdwg.mxu0
        %v391 = vadd.f32 %v285, %v386
        %v392 = vld [vmem:[%s5] sm:$0x1]
        %v394 = vlaneseq
        %v395 = vshrl.u32 %v394, 7
        %v396 = vsub.s32 0, %v395
        %v397 = vrot.slane %v392, %v396
        %v399 = vadd.f32 %v391, %v397
        %v400 = vpack.c.bf16 %v399, %v399
        %s401 = scalar_lea.vmem [#allocation7], 64
        %v402 = vld [vmem:[%s401] sm:$0xf]
        %v403 = vld [vmem:[%s401 + $0x4] sm:$0xf]
        %v404 = vld [vmem:[%s401 + $0x8] sm:$0xf]
        %v405 = vld [vmem:[%s401 + $0xc] sm:$0xf]
        %v406 = vld [vmem:[%s401 + $0x10] sm:$0xf]
        %v407 = vld [vmem:[%s401 + $0x14] sm:$0xf]
        %v408 = vld [vmem:[%s401 + $0x18] sm:$0xf]
        %v409 = vld [vmem:[%s401 + $0x1c] sm:$0xf]
        %v410 = vld [vmem:[%s401 + $0x20] sm:$0xf]
        %v411 = vld [vmem:[%s401 + $0x24] sm:$0xf]
        %v412 = vld [vmem:[%s401 + $0x28] sm:$0xf]
        %v413 = vld [vmem:[%s401 + $0x2c] sm:$0xf]
        %v414 = vld [vmem:[%s401 + $0x30] sm:$0xf]
        %v415 = vld [vmem:[%s401 + $0x34] sm:$0xf]
        %v416 = vld [vmem:[%s401 + $0x38] sm:$0xf]
        %v417 = vld [vmem:[%s401 + $0x3c] sm:$0xf]
        %v434 = vunpack.c.l.b16 %v402
        %v435 = vunpack.c.l.b16 %v403
        %v436 = vunpack.c.l.b16 %v404
        %v437 = vunpack.c.l.b16 %v405
        %v438 = vunpack.c.l.b16 %v406
        %v439 = vunpack.c.l.b16 %v407
        %v440 = vunpack.c.l.b16 %v408
        %v441 = vunpack.c.l.b16 %v409
        %v442 = vunpack.c.l.b16 %v410
        %v443 = vunpack.c.l.b16 %v411
        %v444 = vunpack.c.l.b16 %v412
        %v445 = vunpack.c.l.b16 %v413
        %v446 = vunpack.c.l.b16 %v414
        %v447 = vunpack.c.l.b16 %v415
        %v448 = vunpack.c.l.b16 %v416
        %v449 = vunpack.c.l.b16 %v417
        %v450 = vpack.c.b16 %v435, %v434
        %v451 = vpack.c.b16 %v437, %v436
        %v452 = vpack.c.b16 %v439, %v438
        %v453 = vpack.c.b16 %v441, %v440
        %v454 = vpack.c.b16 %v443, %v442
        %v455 = vpack.c.b16 %v445, %v444
        %v456 = vpack.c.b16 %v447, %v446
        %v457 = vpack.c.b16 %v449, %v448
        %466 = vmatprep.subr.bf16.mxu0 0
        %467 = vmatpush1.bf16.msra.mxu0 %v457
        %468 = vmatprep.subr.bf16.mxu0 0
        %469 = vmatpush1.bf16.msra.mxu0 %v456
        %470 = vmatprep.subr.bf16.mxu0 0
        %471 = vmatpush1.bf16.msra.mxu0 %v455
        %472 = vmatprep.subr.bf16.mxu0 0
        %473 = vmatpush1.bf16.msra.mxu0 %v454
        %474 = vmatprep.subr.bf16.mxu0 0
        %475 = vmatpush1.bf16.msra.mxu0 %v453
        %476 = vmatprep.subr.bf16.mxu0 0
        %477 = vmatpush1.bf16.msra.mxu0 %v452
        %478 = vmatprep.subr.bf16.mxu0 0
        %479 = vmatpush1.bf16.msra.mxu0 %v451
        %480 = vmatprep.subr.bf16.mxu0 0
        %481 = vmatpush1.bf16.msra.mxu0 %v450
        %482 = vmatprep.subr.bf16.mxu0 0
        %483 = vmatpush2.bf16.msra.mxu0 0
        %484 = vmatprep.subr.bf16.mxu0 0
        %485 = vmatpush2.bf16.msra.mxu0 0
        %486 = vmatprep.subr.bf16.mxu0 0
        %487 = vmatpush2.bf16.msra.mxu0 0
        %488 = vmatprep.subr.bf16.mxu0 0
        %489 = vmatpush2.bf16.msra.mxu0 0
        %490 = vmatprep.subr.bf16.mxu0 0
        %491 = vmatpush2.bf16.msra.mxu0 0
        %492 = vmatprep.subr.bf16.mxu0 0
        %493 = vmatpush2.bf16.msra.mxu0 0
        %494 = vmatprep.subr.bf16.mxu0 0
        %495 = vmatpush2.bf16.msra.mxu0 0
        %496 = vmatprep.subr.bf16.mxu0 0
        %497 = vmatpush2.bf16.msra.mxu0 0
        %498 = vmatprep.mubr.bf16.mxu0 0
        %499 = vmatmul.mubr.bf16.gmra.mxu0 %v400
        %v500 = vpop.f32.mrf.mxu0
        %v501 = vadd.f32 0.0, %v500
        %v502 = vpop.f32.mrf.mxu0
        %v503 = vpop.f32.mrf.mxu0
        %v504 = vpop.f32.mrf.mxu0
        %505 = vdwg.mxu0
        %v506 = vadd.f32 %v399, %v501
        %s507 = scalar_lea.vmem %s5, 1
        %v508 = vld [vmem:[%s507] sm:$0x1]
        %v510 = vlaneseq
        %v511 = vshrl.u32 %v510, 7
        %v512 = vsub.s32 0, %v511
        %v513 = vrot.slane %v508, %v512
        %v515 = vadd.f32 %v506, %v513
        %516 = vadd.xlane.f32.xlu0 %v515
        %v517 = vpop.xlane.xlu0 %516
        %v518 = vmul.f32 %v517, 0.03125
        %v519 = vsub.f32 %v515, %v518
        %v520 = vld [vmem:[%s2] sm:$0x1]
        %v522 = vlaneseq
        %v523 = vshrl.u32 %v522, 7
        %v524 = vsub.s32 0, %v523
        %v525 = vrot.slane %v520, %v524
        %v527 = vmul.f32 %v519, %v525
        %v528 = vmul.f32 %v527, %v527
        %529 = vadd.xlane.f32.xlu0 %v528
        %v530 = vpop.xlane.xlu0 %529
        %v531 = vmul.f32 %v530, 0.032258064
        %v532 = vrsqrt.pop %v531
        %v533 = vmul.f32 %v531, %v532
        %vm534 = vcmp.eq.f32.partialorder %v531, inf
        %v535 = vsel %vm534, %v531, %v533
        %vm536 = vcmp.eq.f32.partialorder %v531, 0.0
        %v537 = vand.u32 %v531, 2147483648
        %v538 = vsel %vm536, %v537, %v535
        %v539 = vadd.f32 %v538, 1e-06
        %v540 = vrsqrt.pop %v539
        %s541 = sld [smem:[#allocation3]]
        %v542 = vstv %s541
        %v543 = vmul.f32 %v540, %v542
        %v544 = vmul.f32 %v519, %v543
        %s545 = sld [smem:[#allocation2]]
        %v546 = vstv %s545
        %v547 = vadd.f32 %v544, %v546
        %548 = vst [vmem:[%s283] sm:$0xff] %v547
        %s549 = sand.u32 %s165, 1
        %s550 = scalar_lea.sflag [#allocation6], %s549
        %s551 = sand.u32 %s165, 1
        %s552 = smul.addr %s551, 8
        %s553 = scalar_lea.vmem [#allocation9], %s552
        // Predicated region
        $region53: #{tpu_custom_call.1} parent=43 // pred_check
          %p554 = pneg %p175
        $region54: #{tpu_custom_call.1} parent=43 // pred_check_branch
          %556 = sbr.rel (%p554) target = $region56
        $region55: #{tpu_custom_call.1} parent=43 // pred_region
          %s558 = ssub.s32 128, 128
          %559 = vsyncadd %s550, %s558
          %s560 = smul.addr %s26, 128
          %s561 = scalar_lea.hbm %s6, %s560
          %s563 = sshll.u32 %s553, 4
          %s564 = int_to_ptr.vmem [resolvable:$true] %s563
          %566 = dma.vmem_to_hbm [thread:$0]  %s564, 128, %s561, %s550
        $region56: #{tpu_custom_call.1} parent=43 // pred_fallthru
          _
      $region44: #{tpu_custom_call.1} parent=5 // pred_fallthru
        _
      %p567 = scmp.le.s32.totalorder 2, %s21
      // Predicated region
      $region57: #{tpu_custom_call.1} parent=5 // pred_check
        %p568 = pneg %p567
      $region58: #{tpu_custom_call.1} parent=5 // pred_check_branch
        %570 = sbr.rel (%p568) target = $region60
      $region59: #{tpu_custom_call.1} parent=5 // pred_region
        %s571 = ssub.s32 %s21, 2
        // Predicated region
        $region61: #{tpu_custom_call.1} parent=59 // pred_check
          %p572 = pneg %p181
        $region62: #{tpu_custom_call.1} parent=59 // pred_check_branch
          %574 = sbr.rel (%p572) target = $region64
        $region63: #{tpu_custom_call.1} parent=59 // pred_region
          %s575 = sand.u32 %s166, 1
          %s576 = scalar_lea.sflag [#allocation6], %s575
          %s577 = sand.u32 %s166, 1
          %s578 = smul.addr %s577, 8
          %s579 = scalar_lea.vmem [#allocation9], %s578
          %580 = dma.done %s576, 128
        $region64: #{tpu_custom_call.1} parent=59 // pred_fallthru
          _
      $region60: #{tpu_custom_call.1} parent=5 // pred_fallthru
        _
    $region6: #{tpu_custom_call.1} parent=1 // loop_footer
      %s25 = sadd.s32 1, %s21
    $region7: #{tpu_custom_call.1} parent=1 // loop_footer_branch
      %20 = sbr.rel target = $region3
    $region8: #{tpu_custom_call.1} parent=1 // loop_exit
      _
    %581 = vsyncpa [#allocation5], 1
    %s582 = scalar_lea.sflag [#allocation5], 1
    %583 = vsyncpa %s582, 1
    %584 = vsyncpa [#allocation8], 1
    %585 = vsyncpa [#allocation6], 1
    %s586 = scalar_lea.sflag [#allocation6], 1
    %587 = vsyncpa %s586, 1

</llo_original>
